<compile_context>
chip_gen: v5e
topology: v5e:2x2
jax: 0.10.0
libtpu: 0.0.40
codegen_flags: <defaults>
</compile_context>

<pallas_src>
import jax
import jax.numpy as jnp
from jax.experimental import pallas as pl
from jax.experimental.pallas import tpu as pltpu

# Full-precision f32 matmuls in the pure-JAX reference so the Pallas MXU
# result (f32 accumulation) compares at tight tolerance.
jax.config.update("jax_default_matmul_precision", "highest")


def _silu(x):
    return x * jax.nn.sigmoid(x)


def _round_up(x, m):
    return ((x + m - 1) // m) * m


# ----------------------------- Pallas kernels ------------------------------

def edge_mlp_kernel(hihj_ref, lf_ref, w1hh_ref, w1lf_ref, b1_ref,
                    w2_ref, b2_ref, o_ref):
    """Fused edge MLP over a tile of edges.

    concat([hi, hj, lattice, frac_diff]) @ W1 is computed as one K=2H dot
    (fused hi|hj operand) plus one K=12 dot (lattice|frac), no lane concat.
    """
    h = (jnp.dot(hihj_ref[...], w1hh_ref[...], preferred_element_type=jnp.float32)
         + jnp.dot(lf_ref[...], w1lf_ref[...], preferred_element_type=jnp.float32)
         + b1_ref[...])
    h = _silu(h)
    h = jnp.dot(h, w2_ref[...], preferred_element_type=jnp.float32) + b2_ref[...]
    o_ref[...] = _silu(h)


def node_kernel(lo_ref, hi_ref,                       # scalar-prefetch (SMEM)
                node_ref, ef_ref, src_ref,
                w1a_ref, w1b_ref, b1_ref, w2_ref, b2_ref,
                o_ref, acc_ref, cnt_ref):
    """scatter-mean(edge_features by src) + node MLP + residual.

    Grid = (node tiles, edge tiles).  Edges are pre-sorted by src, so node
    tile i only owns edge tiles in [lo_ref[i], hi_ref[i]]; other edge steps
    are skipped (index_map clamps -> no DMA, pl.when -> no compute).
    """
    i = pl.program_id(0)
    k = pl.program_id(1)

    @pl.when(k == 0)
    def _():
        acc_ref[...] = jnp.zeros_like(acc_ref)
        cnt_ref[...] = jnp.zeros_like(cnt_ref)

    in_range = jnp.logical_and(k >= lo_ref[i], k <= hi_ref[i])

    @pl.when(in_range)
    def _():
        tn = node_ref.shape[0]
        te = ef_ref.shape[0]
        base = i * tn
        node_ids = jax.lax.broadcasted_iota(jnp.int32, (tn, te), 0) + base
        src = src_ref[...]                                # (1, te); padded = -1
        onehot = (node_ids == src).astype(jnp.float32)    # (tn, te) <= 32 vregs
        acc_ref[...] += jnp.dot(onehot, ef_ref[...],
                                preferred_element_type=jnp.float32)
        cnt_ref[...] += jnp.sum(onehot, axis=-1, keepdims=True)

    @pl.when(k == pl.num_programs(1) - 1)
    def _():
        # exact reciprocal to stay within 1e-4 of the reference
        inv = pl.reciprocal(jnp.maximum(cnt_ref[...], 1.0), approx=False)
        acc_ref[...] *= inv                               # mean, in place; empty rows -> 0
        # concat([node, mean]) @ W1 == node @ W1a + mean @ W1b (no lane concat)
        h = (jnp.dot(node_ref[...], w1a_ref[...], preferred_element_type=jnp.float32)
             + jnp.dot(acc_ref[...], w1b_ref[...], preferred_element_type=jnp.float32)
             + b1_ref[...])
        h = _silu(h)
        h = jnp.dot(h, w2_ref[...], preferred_element_type=jnp.float32) + b2_ref[...]
        o_ref[...] = node_ref[...] + _silu(h)             # residual


# ------------------------------- wrapper ------------------------------------

def csp_layer_forward(node_features, frac_coords, lattices, edge_index,
                      edge2graph, params,
                      tile_e_mlp=1024, tile_e_red=128, tile_n=256):
    N, H = node_features.shape
    E = edge_index.shape[1]

    # --- glue (plain JAX): data-dependent gathers + tiny lattice math -------
    # TODO(synk): the per-edge gathers and the argsort are data-dependent and
    # not expressible with a BlockSpec index_map; they stay in XLA.
    src = edge_index[0].astype(jnp.int32)
    dst = edge_index[1].astype(jnp.int32)
    e2g = edge2graph.astype(jnp.int32)

    # sort edges by source node -> each node tile owns a contiguous edge range
    order = jnp.argsort(src)
    src_s = src[order]
    dst_s = dst[order]
    e2g_s = e2g[order]

    # --- tile sizing (static python ints; ragged sizes handled by padding) --
    te_red = min(tile_e_red, _round_up(E, 8))
    mult = max(1, min(tile_e_mlp // te_red, -(-E // te_red)))
    te_mlp = te_red * mult                       # multiple of te_red
    E_pad = _round_up(E, te_mlp)                 # multiple of both tiles

    tn = min(tile_n, _round_up(N, 8))
    if _round_up(N, tn) == tn and tn > 128:
        # keep >= 2 node tiles so the "parallel" axis can span both v7x cores
        tn = _round_up((tn + 1) // 2, 8)
    N_pad = _round_up(N, tn)

    num_n_tiles = N_pad // tn
    num_e_tiles = E_pad // te_red

    # --- pad INDICES (not gathered activations) ------------------------------
    def pad1(x, rows, fill):
        if rows == x.shape[0]:
            return x
        return jnp.concatenate(
            [x, jnp.full((rows - x.shape[0],), fill, x.dtype)], axis=0)

    src_g = pad1(src_s, E_pad, 0)                # valid index for the gathers
    dst_g = pad1(dst_s, E_pad, 0)
    e2g_g = pad1(e2g_s, E_pad, 0)
    src_scatter = pad1(src_s, E_pad, -1).reshape(1, E_pad)   # -1 never matches

    # gathers directly at padded length; hi|hj produced as one (E_pad, 2H) array
    hihj = node_features[jnp.stack([src_g, dst_g], axis=1)].reshape(E_pad, 2 * H)
    frac_diff = jnp.mod(frac_coords[dst_g] - frac_coords[src_g], 1.0)   # (E_pad, 3)
    lattice_ips = jnp.einsum('gij,gkj->gik', lattices, lattices)        # L @ L^T
    lat_edges = lattice_ips.reshape(-1, 9)[e2g_g]                       # (E_pad, 9)
    latfrac = jnp.concatenate([lat_edges, frac_diff], axis=1)           # (E_pad, 12)

    nf_p = node_features if N_pad == N else jnp.concatenate(
        [node_features, jnp.zeros((N_pad - N, H), node_features.dtype)], axis=0)

    # per-node-tile edge-tile ranges (CSR-style) over the SORTED, UNPADDED edges
    tile_starts = jnp.arange(num_n_tiles, dtype=jnp.int32) * tn
    lo_e = jnp.searchsorted(src_s, tile_starts, side='left')
    hi_e = jnp.searchsorted(src_s, tile_starts + tn, side='left') - 1
    empty = hi_e < lo_e
    # empty tiles: lo > any k (never in range); hi = 0 keeps the clamp valid
    lo_tile = jnp.where(empty, num_e_tiles, lo_e // te_red).astype(jnp.int32)
    hi_tile = jnp.where(empty, 0, hi_e // te_red).astype(jnp.int32)

    vmem_cap = 32 * 1024 * 1024   # safe on every TPU gen incl. v7x (64 MiB/TC)

    # --- edge MLP (Pallas, large edge tiles, fused K=2H first dot) -----------
    edge_feat = pl.pallas_call(
        edge_mlp_kernel,
        out_shape=jax.ShapeDtypeStruct((E_pad, H), jnp.float32),
        grid=(E_pad // te_mlp,),
        in_specs=[
            pl.BlockSpec((te_mlp, 2 * H), lambda i: (i, 0)),
            pl.BlockSpec((te_mlp, 12), lambda i: (i, 0)),
            pl.BlockSpec((2 * H, H), lambda i: (0, 0)),
            pl.BlockSpec((12, H), lambda i: (0, 0)),
            pl.BlockSpec((1, H), lambda i: (0, 0)),
            pl.BlockSpec((H, H), lambda i: (0, 0)),
            pl.BlockSpec((1, H), lambda i: (0, 0)),
        ],
        out_specs=pl.BlockSpec((te_mlp, H), lambda i: (i, 0)),
        compiler_params=pltpu.CompilerParams(
            dimension_semantics=("parallel",),
            vmem_limit_bytes=vmem_cap),
    )(hihj, latfrac,
      params['edge_w1_hihj'], params['edge_w1_lf'],
      params['edge_b1'], params['edge_w2'], params['edge_b2'])

    # --- scatter-mean (CSR-limited MXU reduction) + node MLP + residual ------
    def clamp_k(k, lo_ref, hi_ref, i):
        return jnp.minimum(jnp.maximum(k, lo_ref[i]), hi_ref[i])

    out = pl.pallas_call(
        node_kernel,
        out_shape=jax.ShapeDtypeStruct((N_pad, H), jnp.float32),
        grid_spec=pltpu.PrefetchScalarGridSpec(
            num_scalar_prefetch=2,
            grid=(num_n_tiles, num_e_tiles),
            in_specs=[
                pl.BlockSpec((tn, H), lambda i, k, lo, hi: (i, 0)),
                pl.BlockSpec((te_red, H),
                             lambda i, k, lo, hi: (clamp_k(k, lo, hi, i), 0)),
                pl.BlockSpec((1, te_red),
                             lambda i, k, lo, hi: (0, clamp_k(k, lo, hi, i))),
                pl.BlockSpec((H, H), lambda i, k, lo, hi: (0, 0)),
                pl.BlockSpec((H, H), lambda i, k, lo, hi: (0, 0)),
                pl.BlockSpec((1, H), lambda i, k, lo, hi: (0, 0)),
                pl.BlockSpec((H, H), lambda i, k, lo, hi: (0, 0)),
                pl.BlockSpec((1, H), lambda i, k, lo, hi: (0, 0)),
            ],
            out_specs=pl.BlockSpec((tn, H), lambda i, k, lo, hi: (i, 0)),
            scratch_shapes=[pltpu.VMEM((tn, H), jnp.float32),
                            pltpu.VMEM((tn, 1), jnp.float32)]),
        compiler_params=pltpu.CompilerParams(
            dimension_semantics=("parallel", "arbitrary"),
            vmem_limit_bytes=vmem_cap),
    )(lo_tile, hi_tile, nf_p, edge_feat, src_scatter,
      params['node_w1a'], params['node_w1b'], params['node_b1'],
      params['node_w2'], params['node_b2'])

    return out[:N]


# ------------------------- pure-JAX reference --------------------------------

def csp_layer_reference(node_features, frac_coords, lattices, edge_index,
                        edge2graph, params):
    N, H = node_features.shape
    src, dst = edge_index[0], edge_index[1]
    hi, hj = node_features[src], node_features[dst]
    frac_diff = jnp.mod(frac_coords[dst] - frac_coords[src], 1.0)
    lat = jnp.einsum('gij,gkj->gik', lattices, lattices).reshape(-1, 9)[edge2graph]
    x = jnp.concatenate([hi, hj, lat, frac_diff], axis=1)
    h = _silu(x @ params['edge_w1_full'] + params['edge_b1'])
    ef = _silu(h @ params['edge_w2'] + params['edge_b2'])
    sums = jax.ops.segment_sum(ef, src, num_segments=N)
    cnts = jax.ops.segment_sum(jnp.ones((ef.shape[0],), jnp.float32), src,
                               num_segments=N)
    agg = sums / jnp.maximum(cnts, 1.0)[:, None]
    x2 = jnp.concatenate([node_features, agg], axis=1)
    h2 = _silu(x2 @ params['node_w1_full'] + params['node_b1'])
    out = _silu(h2 @ params['node_w2'] + params['node_b2'])
    return node_features + out


# --------------------------------- main --------------------------------------

if __name__ == "__main__":
    H = 128         # hidden_dim (module default; lane-dense last dim)
    N = 8           # nodes
    E = 16          # edges
    G = 2           # graphs
    D_in = 2 * H + 9 + 3

    key = jax.random.PRNGKey(0)
    ks = jax.random.split(key, 16)

    # deterministic synthetic parameters (per nn.Linear, stored [in, out])
    edge_w1 = 0.1 * jax.random.normal(ks[0], (D_in, H), jnp.float32)
    node_w1 = 0.1 * jax.random.normal(ks[4], (2 * H, H), jnp.float32)
    params = {
        # split first edge Linear by input block: [hi|hj] and [lattice|frac]
        'edge_w1_full': edge_w1,
        'edge_w1_hihj': edge_w1[:2 * H],
        'edge_w1_lf': edge_w1[2 * H:],
        'edge_b1': 0.1 * jax.random.normal(ks[1], (1, H), jnp.float32),
        'edge_w2': 0.1 * jax.random.normal(ks[2], (H, H), jnp.float32),
        'edge_b2': 0.1 * jax.random.normal(ks[3], (1, H), jnp.float32),
        # split first node Linear by input block: [node | aggregated mean]
        'node_w1_full': node_w1,
        'node_w1a': node_w1[:H],
        'node_w1b': node_w1[H:],
        'node_b1': 0.1 * jax.random.normal(ks[5], (1, H), jnp.float32),
        'node_w2': 0.1 * jax.random.normal(ks[6], (H, H), jnp.float32),
        'node_b2': 0.1 * jax.random.normal(ks[7], (1, H), jnp.float32),
    }

    node_features = jax.random.normal(ks[8], (N, H), jnp.float32)
    frac_coords = jax.random.uniform(ks[9], (N, 3), jnp.float32)
    lattices = jax.random.normal(ks[10], (G, 3, 3), jnp.float32)
    edge_index = jax.random.randint(ks[11], (2, E), 0, N, jnp.int32)
    edge2graph = jax.random.randint(ks[12], (E,), 0, G, jnp.int32)

    out = csp_layer_forward(node_features, frac_coords, lattices,
                            edge_index, edge2graph, params)
    out = jax.block_until_ready(out)

    ref = csp_layer_reference(node_features, frac_coords, lattices,
                              edge_index, edge2graph, params)
    assert out.shape == (N, H) and out.dtype == jnp.float32
    assert jnp.allclose(out, ref, rtol=1e-4, atol=1e-4), "mismatch vs reference"

    print("KERNEL_OK")
</pallas_src>

<mosaic_0001>
module attributes {stable_mosaic.version = 11 : i64} {
  func.func @edge_mlp_kernel(%arg0: i32, %arg1: memref<16x256xf32, #tpu.memory_space<vmem>>, %arg2: memref<16x12xf32, #tpu.memory_space<vmem>>, %arg3: memref<256x128xf32, #tpu.memory_space<vmem>>, %arg4: memref<12x128xf32, #tpu.memory_space<vmem>>, %arg5: memref<1x128xf32, #tpu.memory_space<vmem>>, %arg6: memref<128x128xf32, #tpu.memory_space<vmem>>, %arg7: memref<1x128xf32, #tpu.memory_space<vmem>>, %arg8: memref<16x128xf32, #tpu.memory_space<vmem>>) attributes {dimension_semantics = [#tpu.dimension_semantics<parallel>], iteration_bounds = array<i64: 1>, scalar_prefetch = 0 : i64, scratch_operands = 0 : i64, tpu.core_type = #tpu.core_type<tc>, window_params = [{transform_indices = @transform_0, window_bounds = array<i64: 16, 256>}, {transform_indices = @transform_1, window_bounds = array<i64: 16, 12>}, {pipeline_mode = #tpu.pipeline_mode<synchronous>, transform_indices = @transform_2, window_bounds = array<i64: 256, 128>}, {pipeline_mode = #tpu.pipeline_mode<synchronous>, transform_indices = @transform_3, window_bounds = array<i64: 12, 128>}, {pipeline_mode = #tpu.pipeline_mode<synchronous>, transform_indices = @transform_4, window_bounds = array<i64: 1, 128>}, {pipeline_mode = #tpu.pipeline_mode<synchronous>, transform_indices = @transform_5, window_bounds = array<i64: 128, 128>}, {pipeline_mode = #tpu.pipeline_mode<synchronous>, transform_indices = @transform_6, window_bounds = array<i64: 1, 128>}, {transform_indices = @transform_7, window_bounds = array<i64: 16, 128>}]} {
    %c0 = arith.constant 0 : index
    %c0_0 = arith.constant 0 : index
    %0 = vector.load %arg1[%c0, %c0_0] : memref<16x256xf32, #tpu.memory_space<vmem>>, vector<16x256xf32>
    %c0_1 = arith.constant 0 : index
    %c0_2 = arith.constant 0 : index
    %1 = vector.load %arg3[%c0_1, %c0_2] : memref<256x128xf32, #tpu.memory_space<vmem>>, vector<256x128xf32>
    %cst = arith.constant dense<0.000000e+00> : vector<16x128xf32>
    %2 = tpu.matmul %0, %1, %cst {dimension_numbers = #tpu.dot_dimension_numbers<[1], [0], [0], [1], [0, 0, 1, 1], [], []>, precision = #tpu.contract_precision<fp32>} : vector<16x256xf32>, vector<256x128xf32>, vector<16x128xf32> -> vector<16x128xf32>
    %c0_3 = arith.constant 0 : index
    %c0_4 = arith.constant 0 : index
    %3 = vector.load %arg2[%c0_3, %c0_4] : memref<16x12xf32, #tpu.memory_space<vmem>>, vector<16x12xf32>
    %c0_5 = arith.constant 0 : index
    %c0_6 = arith.constant 0 : index
    %4 = vector.load %arg4[%c0_5, %c0_6] : memref<12x128xf32, #tpu.memory_space<vmem>>, vector<12x128xf32>
    %cst_7 = arith.constant dense<0.000000e+00> : vector<16x128xf32>
    %5 = tpu.matmul %3, %4, %cst_7 {dimension_numbers = #tpu.dot_dimension_numbers<[1], [0], [0], [1], [0, 0, 1, 1], [], []>, precision = #tpu.contract_precision<fp32>} : vector<16x12xf32>, vector<12x128xf32>, vector<16x128xf32> -> vector<16x128xf32>
    %6 = arith.addf %2, %5 : vector<16x128xf32>
    %c0_8 = arith.constant 0 : index
    %c0_9 = arith.constant 0 : index
    %7 = vector.load %arg5[%c0_8, %c0_9] : memref<1x128xf32, #tpu.memory_space<vmem>>, vector<1x128xf32>
    %8 = vector.broadcast %7 : vector<1x128xf32> to vector<16x128xf32>
    %9 = arith.addf %6, %8 : vector<16x128xf32>
    %10 = arith.negf %9 : vector<16x128xf32>
    %11 = math.exp %10 : vector<16x128xf32>
    %cst_10 = arith.constant 1.000000e+00 : f32
    %12 = vector.broadcast %cst_10 : f32 to vector<16x128xf32>
    %13 = arith.addf %12, %11 : vector<16x128xf32>
    %14 = arith.divf %12, %13 : vector<16x128xf32>
    %15 = arith.mulf %9, %14 : vector<16x128xf32>
    %c0_11 = arith.constant 0 : index
    %c0_12 = arith.constant 0 : index
    %16 = vector.load %arg6[%c0_11, %c0_12] : memref<128x128xf32, #tpu.memory_space<vmem>>, vector<128x128xf32>
    %cst_13 = arith.constant dense<0.000000e+00> : vector<16x128xf32>
    %17 = tpu.matmul %15, %16, %cst_13 {dimension_numbers = #tpu.dot_dimension_numbers<[1], [0], [0], [1], [0, 0, 1, 1], [], []>, precision = #tpu.contract_precision<fp32>} : vector<16x128xf32>, vector<128x128xf32>, vector<16x128xf32> -> vector<16x128xf32>
    %c0_14 = arith.constant 0 : index
    %c0_15 = arith.constant 0 : index
    %18 = vector.load %arg7[%c0_14, %c0_15] : memref<1x128xf32, #tpu.memory_space<vmem>>, vector<1x128xf32>
    %19 = vector.broadcast %18 : vector<1x128xf32> to vector<16x128xf32>
    %20 = arith.addf %17, %19 : vector<16x128xf32>
    %21 = arith.negf %20 : vector<16x128xf32>
    %22 = math.exp %21 : vector<16x128xf32>
    %cst_16 = arith.constant 1.000000e+00 : f32
    %23 = vector.broadcast %cst_16 : f32 to vector<16x128xf32>
    %24 = arith.addf %23, %22 : vector<16x128xf32>
    %25 = arith.divf %23, %24 : vector<16x128xf32>
    %26 = arith.mulf %20, %25 : vector<16x128xf32>
    %c0_17 = arith.constant 0 : index
    %c0_18 = arith.constant 0 : index
    %27 = vector.load %arg8[%c0_17, %c0_18] : memref<16x128xf32, #tpu.memory_space<vmem>>, vector<16x128xf32>
    tpu.vector_store %arg8[%c0_17, %c0_18], %26 {strides = array<i32>} : memref<16x128xf32, #tpu.memory_space<vmem>>, vector<16x128xf32>,
    return
  }
  func.func @transform_0(%arg0: i32) -> (i32, i32) {
    %c0_i32 = arith.constant 0 : i32
    %c0_i32_0 = arith.constant 0 : i32
    return %arg0, %c0_i32 : i32, i32
  }
  func.func @transform_1(%arg0: i32) -> (i32, i32) {
    %c0_i32 = arith.constant 0 : i32
    %c0_i32_0 = arith.constant 0 : i32
    return %arg0, %c0_i32 : i32, i32
  }
  func.func @transform_2(%arg0: i32) -> (i32, i32) {
    %c0_i32 = arith.constant 0 : i32
    %c0_i32_0 = arith.constant 0 : i32
    %c0_i32_1 = arith.constant 0 : i32
    return %c0_i32, %c0_i32_0 : i32, i32
  }
  func.func @transform_3(%arg0: i32) -> (i32, i32) {
    %c0_i32 = arith.constant 0 : i32
    %c0_i32_0 = arith.constant 0 : i32
    %c0_i32_1 = arith.constant 0 : i32
    return %c0_i32, %c0_i32_0 : i32, i32
  }
  func.func @transform_4(%arg0: i32) -> (i32, i32) {
    %c0_i32 = arith.constant 0 : i32
    %c0_i32_0 = arith.constant 0 : i32
    %c0_i32_1 = arith.constant 0 : i32
    return %c0_i32, %c0_i32_0 : i32, i32
  }
  func.func @transform_5(%arg0: i32) -> (i32, i32) {
    %c0_i32 = arith.constant 0 : i32
    %c0_i32_0 = arith.constant 0 : i32
    %c0_i32_1 = arith.constant 0 : i32
    return %c0_i32, %c0_i32_0 : i32, i32
  }
  func.func @transform_6(%arg0: i32) -> (i32, i32) {
    %c0_i32 = arith.constant 0 : i32
    %c0_i32_0 = arith.constant 0 : i32
    %c0_i32_1 = arith.constant 0 : i32
    return %c0_i32, %c0_i32_0 : i32, i32
  }
  func.func @transform_7(%arg0: i32) -> (i32, i32) {
    %c0_i32 = arith.constant 0 : i32
    %c0_i32_0 = arith.constant 0 : i32
    return %arg0, %c0_i32 : i32, i32
  }
}

</mosaic_0001>

<llo_original>
// kernel: tpu_custom_call.1
$region0: #{tpu_custom_call.1}
  #allocation0 [shape = 'u32[]', space=smem, size = 0x4, offset = 0x4, fixed_abs, tag = 'smem constant byte address 0x4 - core index']
  #allocation1 [shape = 'u32[72,128]{1,0:T(1,128)}', space=vmem, size = 0x9000, scoped, tag = 'internal scratch']
  %s0 = inlined_call_operand.hbm [shape: f32[16,256], index: 0, kind: input, shape index: {}]
  %s1 = inlined_call_operand.hbm [shape: f32[16,12], index: 1, kind: input, shape index: {}]
  %s2 = inlined_call_operand.hbm [shape: f32[256,128], index: 2, kind: input, shape index: {}]
  %s3 = inlined_call_operand.hbm [shape: f32[12,128], index: 3, kind: input, shape index: {}]
  %s4 = inlined_call_operand.vmem [shape: f32[1,128], index: 4, kind: input, shape index: {}]
  %s5 = inlined_call_operand.hbm [shape: f32[128,128], index: 5, kind: input, shape index: {}]
  %s6 = inlined_call_operand.vmem [shape: f32[1,128], index: 6, kind: input, shape index: {}]
  %s7 = inlined_call_operand.hbm [shape: f32[16,128], index: 7, kind: output, shape index: {}]
  %s8 = sld [smem:[#allocation0]]
  $region58: #{tpu_custom_call.1} parent=0
    _
  %s10 = ssub.s32 1, %s8
  %s11 = scalar_select 0, %s10, %s8
  $region1: #{tpu_custom_call.1} parent=0
    #allocation2 [shape = 'u8[16384]{0}', space=vmem, size = 0x4000, scoped, tag = 'input window, operand 0, single buffered']
    #allocation3 [shape = 's32[1]{0}', space=sflag, size = 0x4, scoped, tag = 'scoped memory for tpu_custom_call.1']
    #allocation4 [shape = 's32[1]{0}', space=sflag, size = 0x4, scoped, tag = 'scoped memory for tpu_custom_call.1']
    #allocation5 [shape = 'u8[8192]{0}', space=vmem, size = 0x2000, scoped, tag = 'input window, operand 1, single buffered']
    #allocation6 [shape = 's32[1]{0}', space=sflag, size = 0x4, scoped, tag = 'scoped memory for tpu_custom_call.1']
    #allocation7 [shape = 'u8[131072]{0}', space=vmem, size = 0x20000, scoped, tag = 'input window, operand 2, single buffered']
    #allocation8 [shape = 'u8[8192]{0}', space=vmem, size = 0x2000, scoped, tag = 'input window, operand 3, single buffered']
    #allocation9 [shape = 's32[1]{0}', space=sflag, size = 0x4, scoped, tag = 'scoped memory for tpu_custom_call.1']
    #allocation10 [shape = 'u8[65536]{0}', space=vmem, size = 0x10000, scoped, tag = 'input window, operand 5, single buffered']
    #allocation11 [shape = 'u8[8192]{0}', space=vmem, size = 0x2000, scoped, tag = 'output window, operand 0, single buffered']
    %12 = vsyncpa [#allocation3], 0
    %13 = vsyncpa [#allocation6], 0
    %14 = vsyncpa [#allocation9], 0
    %15 = vsyncpa [#allocation4], 0
    // Predicated region
    $region2: #{tpu_custom_call.1} parent=1 // pred_check
      _
    $region3: #{tpu_custom_call.1} parent=1 // pred_check_branch
      %17 = sbr.rel (0) target = $region5
    $region4: #{tpu_custom_call.1} parent=1 // pred_region
      %19 = vsyncadd [#allocation3], 0
      %s20 = sshll.u32 %s0, 4
      %s21 = int_to_ptr.hbm [resolvable:$true] %s20
      %s22 = sshll.u32 [#allocation2], 4
      %s23 = int_to_ptr.vmem [resolvable:$true] %s22
      %28 = dma.hbm_to_vmem [thread:$0]  %s21, 512, %s23, [#allocation3], 256, 256, 16
    $region5: #{tpu_custom_call.1} parent=1 // pred_fallthru
      _
    // Predicated region
    $region6: #{tpu_custom_call.1} parent=1 // pred_check
      _
    $region7: #{tpu_custom_call.1} parent=1 // pred_check_branch
      %30 = sbr.rel (0) target = $region9
    $region8: #{tpu_custom_call.1} parent=1 // pred_region
      %32 = vsyncadd [#allocation6], 0
      %s33 = sshll.u32 %s1, 4
      %s34 = int_to_ptr.hbm [resolvable:$true] %s33
      %s35 = sshll.u32 [#allocation5], 4
      %s36 = int_to_ptr.vmem [resolvable:$true] %s35
      %41 = dma.hbm_to_vmem [thread:$0]  %s34, 256, %s36, [#allocation6], 128, 128, 8
    $region9: #{tpu_custom_call.1} parent=1 // pred_fallthru
      _
    // Predicated region
    $region10: #{tpu_custom_call.1} parent=1 // pred_check
      _
    $region11: #{tpu_custom_call.1} parent=1 // pred_check_branch
      %43 = sbr.rel (0) target = $region13
    $region12: #{tpu_custom_call.1} parent=1 // pred_region
      %45 = vsyncadd [#allocation6], 0
      %s46 = sshll.u32 %s2, 4
      %s47 = int_to_ptr.hbm [resolvable:$true] %s46
      %s48 = sshll.u32 [#allocation7], 4
      %s49 = int_to_ptr.vmem [resolvable:$true] %s48
      %54 = dma.hbm_to_vmem [thread:$0]  %s47, 4096, %s49, [#allocation6], 128, 128, 8
    $region13: #{tpu_custom_call.1} parent=1 // pred_fallthru
      _
    // Predicated region
    $region14: #{tpu_custom_call.1} parent=1 // pred_check
      _
    $region15: #{tpu_custom_call.1} parent=1 // pred_check_branch
      %56 = sbr.rel (0) target = $region17
    $region16: #{tpu_custom_call.1} parent=1 // pred_region
      %58 = vsyncadd [#allocation9], 0
      %s59 = sshll.u32 %s3, 4
      %s60 = int_to_ptr.hbm [resolvable:$true] %s59
      %s61 = sshll.u32 [#allocation8], 4
      %s62 = int_to_ptr.vmem [resolvable:$true] %s61
      %67 = dma.hbm_to_vmem [thread:$0]  %s60, 256, %s62, [#allocation9], 128, 128, 8
    $region17: #{tpu_custom_call.1} parent=1 // pred_fallthru
      _
    // Predicated region
    $region18: #{tpu_custom_call.1} parent=1 // pred_check
      _
    $region19: #{tpu_custom_call.1} parent=1 // pred_check_branch
      %69 = sbr.rel (0) target = $region21
    $region20: #{tpu_custom_call.1} parent=1 // pred_region
      _
    $region21: #{tpu_custom_call.1} parent=1 // pred_fallthru
      _
    // Predicated region
    $region22: #{tpu_custom_call.1} parent=1 // pred_check
      _
    $region23: #{tpu_custom_call.1} parent=1 // pred_check_branch
      %71 = sbr.rel (0) target = $region25
    $region24: #{tpu_custom_call.1} parent=1 // pred_region
      %73 = vsyncadd [#allocation9], 0
      %s74 = sshll.u32 %s5, 4
      %s75 = int_to_ptr.hbm [resolvable:$true] %s74
      %s76 = sshll.u32 [#allocation10], 4
      %s77 = int_to_ptr.vmem [resolvable:$true] %s76
      %82 = dma.hbm_to_vmem [thread:$0]  %s75, 2048, %s77, [#allocation9], 128, 128, 8
    $region25: #{tpu_custom_call.1} parent=1 // pred_fallthru
      _
    // Predicated region
    $region26: #{tpu_custom_call.1} parent=1 // pred_check
      _
    $region27: #{tpu_custom_call.1} parent=1 // pred_check_branch
      %84 = sbr.rel (0) target = $region29
    $region28: #{tpu_custom_call.1} parent=1 // pred_region
      _
    $region29: #{tpu_custom_call.1} parent=1 // pred_fallthru
      _
    // Predicated region
    $region30: #{tpu_custom_call.1} parent=1 // pred_check
      _
    $region31: #{tpu_custom_call.1} parent=1 // pred_check_branch
      %86 = sbr.rel (0) target = $region33
    $region32: #{tpu_custom_call.1} parent=1 // pred_region
      %88 = dma.done [#allocation3], 512
    $region33: #{tpu_custom_call.1} parent=1 // pred_fallthru
      _
    // Predicated region
    $region34: #{tpu_custom_call.1} parent=1 // pred_check
      _
    $region35: #{tpu_custom_call.1} parent=1 // pred_check_branch
      %90 = sbr.rel (0) target = $region37
    $region36: #{tpu_custom_call.1} parent=1 // pred_region
      %92 = dma.done [#allocation6], 256
    $region37: #{tpu_custom_call.1} parent=1 // pred_fallthru
      _
    // Predicated region
    $region38: #{tpu_custom_call.1} parent=1 // pred_check
      _
    $region39: #{tpu_custom_call.1} parent=1 // pred_check_branch
      %94 = sbr.rel (0) target = $region41
    $region40: #{tpu_custom_call.1} parent=1 // pred_region
      %96 = dma.done [#allocation6], 4096
    $region41: #{tpu_custom_call.1} parent=1 // pred_fallthru
      _
    // Predicated region
    $region42: #{tpu_custom_call.1} parent=1 // pred_check
      _
    $region43: #{tpu_custom_call.1} parent=1 // pred_check_branch
      %98 = sbr.rel (0) target = $region45
    $region44: #{tpu_custom_call.1} parent=1 // pred_region
      %100 = dma.done [#allocation9], 256
    $region45: #{tpu_custom_call.1} parent=1 // pred_fallthru
      _
    // Predicated region
    $region46: #{tpu_custom_call.1} parent=1 // pred_check
      _
    $region47: #{tpu_custom_call.1} parent=1 // pred_check_branch
      %102 = sbr.rel (0) target = $region49
    $region48: #{tpu_custom_call.1} parent=1 // pred_region
      %104 = dma.done [#allocation9], 2048
    $region49: #{tpu_custom_call.1} parent=1 // pred_fallthru
      _
    %v105 = vld [vmem:[#allocation2] sm:$0xff]
    %v106 = vld [vmem:[#allocation2 + $0x8] sm:$0xff]
    %v107 = vld [vmem:[#allocation2 + $0x10] sm:$0xff]
    %v108 = vld [vmem:[#allocation2 + $0x18] sm:$0xff]
    %v109 = vld [vmem:[#allocation7] sm:$0xff]
    %v110 = vld [vmem:[#allocation7 + $0x8] sm:$0xff]
    %v111 = vld [vmem:[#allocation7 + $0x10] sm:$0xff]
    %v112 = vld [vmem:[#allocation7 + $0x18] sm:$0xff]
    %v113 = vld [vmem:[#allocation7 + $0x20] sm:$0xff]
    %v114 = vld [vmem:[#allocation7 + $0x28] sm:$0xff]
    %v115 = vld [vmem:[#allocation7 + $0x30] sm:$0xff]
    %v116 = vld [vmem:[#allocation7 + $0x38] sm:$0xff]
    %v117 = vld [vmem:[#allocation7 + $0x40] sm:$0xff]
    %v118 = vld [vmem:[#allocation7 + $0x48] sm:$0xff]
    %v119 = vld [vmem:[#allocation7 + $0x50] sm:$0xff]
    %v120 = vld [vmem:[#allocation7 + $0x58] sm:$0xff]
    %v121 = vld [vmem:[#allocation7 + $0x60] sm:$0xff]
    %v122 = vld [vmem:[#allocation7 + $0x68] sm:$0xff]
    %v123 = vld [vmem:[#allocation7 + $0x70] sm:$0xff]
    %v124 = vld [vmem:[#allocation7 + $0x78] sm:$0xff]
    %v125 = vld [vmem:[#allocation7 + $0x80] sm:$0xff]
    %v126 = vld [vmem:[#allocation7 + $0x88] sm:$0xff]
    %v127 = vld [vmem:[#allocation7 + $0x90] sm:$0xff]
    %v128 = vld [vmem:[#allocation7 + $0x98] sm:$0xff]
    %v129 = vld [vmem:[#allocation7 + $0xa0] sm:$0xff]
    %v130 = vld [vmem:[#allocation7 + $0xa8] sm:$0xff]
    %v131 = vld [vmem:[#allocation7 + $0xb0] sm:$0xff]
    %v132 = vld [vmem:[#allocation7 + $0xb8] sm:$0xff]
    %v133 = vld [vmem:[#allocation7 + $0xc0] sm:$0xff]
    %v134 = vld [vmem:[#allocation7 + $0xc8] sm:$0xff]
    %v135 = vld [vmem:[#allocation7 + $0xd0] sm:$0xff]
    %v136 = vld [vmem:[#allocation7 + $0xd8] sm:$0xff]
    %v137 = vld [vmem:[#allocation7 + $0xe0] sm:$0xff]
    %v138 = vld [vmem:[#allocation7 + $0xe8] sm:$0xff]
    %v139 = vld [vmem:[#allocation7 + $0xf0] sm:$0xff]
    %v140 = vld [vmem:[#allocation7 + $0xf8] sm:$0xff]
    %v141 = vld [vmem:[#allocation5] sm:$0xff]
    %v142 = vld [vmem:[#allocation5 + $0x8] sm:$0xff]
    %v143 = vld [vmem:[#allocation8] sm:$0xff]
    %v144 = vld [vmem:[#allocation8 + $0x8] sm:$0xf]
    %vm145 = vcmask 97280
    %v147 = vsel %vm145, %v141, 0
    %v150 = vsel %vm145, %v142, 0
    %vm152 = vcmask 1043456
    %v154 = vsel %vm152, %v144, 0
    %156 = vmatpush.msra.mxu0 0.0
    %157 = vmatpush.msra.mxu0 0.0
    %158 = vmatpush.msra.mxu0 0.0
    %159 = vmatpush.msra.mxu0 0.0
    %160 = vmatpush.msra.mxu0 0.0
    %161 = vmatpush.msra.mxu0 0.0
    %162 = vmatpush.msra.mxu0 0.0
    %163 = vmatpush.msra.mxu0 0.0
    %164 = vmatpush.msra.mxu0 0.0
    %165 = vmatpush.msra.mxu0 0.0
    %166 = vmatpush.msra.mxu0 0.0
    %167 = vmatpush.msra.mxu0 0.0
    %168 = vmatpush.msra.mxu0 0.0
    %169 = vmatpush.msra.mxu0 0.0
    %v170 = vand.u32 %v154, 4294901760
    %171 = vmatpush.msra.mxu0 %v170
    %v172 = vand.u32 %v143, 4294901760
    %173 = vmatpush.msra.mxu0 %v172
    %v174 = vand.u32 %v147, 4294901760
    %v175 = vsub.f32 %v147, %v174
    %v176 = vand.u32 %v175, 4294901760
    %v177 = vsub.f32 %v175, %v176
    %v178 = vand.u32 %v177, 4294901760
    %179 = vmatmul.f32.gmra.mxu0 %v178
    %v180 = vpop.f32.mrf.mxu0
    %v181 = vadd.f32 0.0, %v180
    %v182 = vand.u32 %v150, 4294901760
    %v183 = vsub.f32 %v150, %v182
    %v184 = vand.u32 %v183, 4294901760
    %v185 = vsub.f32 %v183, %v184
    %v186 = vand.u32 %v185, 4294901760
    %187 = vmatmul.f32.gmra.mxu0 %v186
    %v188 = vpop.f32.mrf.mxu0
    %v189 = vadd.f32 0.0, %v188
    %190 = vdwg.mxu0
    %191 = vmatpush.msra.mxu0 0.0
    %192 = vmatpush.msra.mxu0 0.0
    %193 = vmatpush.msra.mxu0 0.0
    %194 = vmatpush.msra.mxu0 0.0
    %195 = vmatpush.msra.mxu0 0.0
    %196 = vmatpush.msra.mxu0 0.0
    %197 = vmatpush.msra.mxu0 0.0
    %198 = vmatpush.msra.mxu0 0.0
    %199 = vmatpush.msra.mxu0 0.0
    %200 = vmatpush.msra.mxu0 0.0
    %201 = vmatpush.msra.mxu0 0.0
    %202 = vmatpush.msra.mxu0 0.0
    %203 = vmatpush.msra.mxu0 0.0
    %204 = vmatpush.msra.mxu0 0.0
    %v205 = vand.u32 %v154, 4294901760
    %v206 = vsub.f32 %v154, %v205
    %v207 = vand.u32 %v206, 4294901760
    %v208 = vsub.f32 %v206, %v207
    %v209 = vand.u32 %v208, 4294901760
    %210 = vmatpush.msra.mxu0 %v209
    %v211 = vand.u32 %v143, 4294901760
    %v212 = vsub.f32 %v143, %v211
    %v213 = vand.u32 %v212, 4294901760
    %v214 = vsub.f32 %v212, %v213
    %v215 = vand.u32 %v214, 4294901760
    %216 = vmatpush.msra.mxu0 %v215
    %v217 = vand.u32 %v147, 4294901760
    %218 = vmatmul.f32.gmra.mxu0 %v217
    %v219 = vpop.f32.mrf.mxu0
    %v220 = vadd.f32 %v181, %v219
    %v221 = vand.u32 %v150, 4294901760
    %222 = vmatmul.f32.gmra.mxu0 %v221
    %v223 = vpop.f32.mrf.mxu0
    %v224 = vadd.f32 %v189, %v223
    %225 = vdwg.mxu0
    %226 = vmatpush.msra.mxu0 0.0
    %227 = vmatpush.msra.mxu0 0.0
    %228 = vmatpush.msra.mxu0 0.0
    %229 = vmatpush.msra.mxu0 0.0
    %230 = vmatpush.msra.mxu0 0.0
    %231 = vmatpush.msra.mxu0 0.0
    %232 = vmatpush.msra.mxu0 0.0
    %233 = vmatpush.msra.mxu0 0.0
    %234 = vmatpush.msra.mxu0 0.0
    %235 = vmatpush.msra.mxu0 0.0
    %236 = vmatpush.msra.mxu0 0.0
    %237 = vmatpush.msra.mxu0 0.0
    %238 = vmatpush.msra.mxu0 0.0
    %239 = vmatpush.msra.mxu0 0.0
    %v240 = vand.u32 %v154, 4294901760
    %v241 = vsub.f32 %v154, %v240
    %242 = vmatpush.msra.mxu0 %v241
    %v243 = vand.u32 %v143, 4294901760
    %v244 = vsub.f32 %v143, %v243
    %245 = vmatpush.msra.mxu0 %v244
    %v246 = vand.u32 %v147, 4294901760
    %v247 = vsub.f32 %v147, %v246
    %248 = vmatmul.f32.gmra.mxu0 %v247
    %v249 = vpop.f32.mrf.mxu0
    %v250 = vadd.f32 %v220, %v249
    %v251 = vand.u32 %v150, 4294901760
    %v252 = vsub.f32 %v150, %v251
    %253 = vmatmul.f32.gmra.mxu0 %v252
    %v254 = vpop.f32.mrf.mxu0
    %v255 = vadd.f32 %v224, %v254
    %256 = vdwg.mxu0
    %257 = vmatpush.msra.mxu0 0.0
    %258 = vmatpush.msra.mxu0 0.0
    %259 = vmatpush.msra.mxu0 0.0
    %260 = vmatpush.msra.mxu0 0.0
    %261 = vmatpush.msra.mxu0 0.0
    %262 = vmatpush.msra.mxu0 0.0
    %263 = vmatpush.msra.mxu0 0.0
    %264 = vmatpush.msra.mxu0 0.0
    %265 = vmatpush.msra.mxu0 0.0
    %266 = vmatpush.msra.mxu0 0.0
    %267 = vmatpush.msra.mxu0 0.0
    %268 = vmatpush.msra.mxu0 0.0
    %269 = vmatpush.msra.mxu0 0.0
    %270 = vmatpush.msra.mxu0 0.0
    %v271 = vand.u32 %v154, 4294901760
    %272 = vmatpush.msra.mxu0 %v271
    %v273 = vand.u32 %v143, 4294901760
    %274 = vmatpush.msra.mxu0 %v273
    %v275 = vand.u32 %v147, 4294901760
    %v276 = vsub.f32 %v147, %v275
    %v277 = vand.u32 %v276, 4294901760
    %278 = vmatmul.f32.gmra.mxu0 %v277
    %v279 = vpop.f32.mrf.mxu0
    %v280 = vadd.f32 %v250, %v279
    %v281 = vand.u32 %v150, 4294901760
    %v282 = vsub.f32 %v150, %v281
    %v283 = vand.u32 %v282, 4294901760
    %284 = vmatmul.f32.gmra.mxu0 %v283
    %v285 = vpop.f32.mrf.mxu0
    %v286 = vadd.f32 %v255, %v285
    %287 = vdwg.mxu0
    %288 = vmatpush.msra.mxu0 0.0
    %289 = vmatpush.msra.mxu0 0.0
    %290 = vmatpush.msra.mxu0 0.0
    %291 = vmatpush.msra.mxu0 0.0
    %292 = vmatpush.msra.mxu0 0.0
    %293 = vmatpush.msra.mxu0 0.0
    %294 = vmatpush.msra.mxu0 0.0
    %295 = vmatpush.msra.mxu0 0.0
    %296 = vmatpush.msra.mxu0 0.0
    %297 = vmatpush.msra.mxu0 0.0
    %298 = vmatpush.msra.mxu0 0.0
    %299 = vmatpush.msra.mxu0 0.0
    %300 = vmatpush.msra.mxu0 0.0
    %301 = vmatpush.msra.mxu0 0.0
    %v302 = vand.u32 %v154, 4294901760
    %v303 = vsub.f32 %v154, %v302
    %v304 = vand.u32 %v303, 4294901760
    %305 = vmatpush.msra.mxu0 %v304
    %v306 = vand.u32 %v143, 4294901760
    %v307 = vsub.f32 %v143, %v306
    %v308 = vand.u32 %v307, 4294901760
    %309 = vmatpush.msra.mxu0 %v308
    %v310 = vand.u32 %v147, 4294901760
    %311 = vmatmul.f32.gmra.mxu0 %v310
    %v312 = vpop.f32.mrf.mxu0
    %v313 = vadd.f32 %v280, %v312
    %v314 = vand.u32 %v150, 4294901760
    %315 = vmatmul.f32.gmra.mxu0 %v314
    %v316 = vpop.f32.mrf.mxu0
    %v317 = vadd.f32 %v286, %v316
    %318 = vdwg.mxu0
    %319 = vmatpush.msra.mxu0 0.0
    %320 = vmatpush.msra.mxu0 0.0
    %321 = vmatpush.msra.mxu0 0.0
    %322 = vmatpush.msra.mxu0 0.0
    %323 = vmatpush.msra.mxu0 0.0
    %324 = vmatpush.msra.mxu0 0.0
    %325 = vmatpush.msra.mxu0 0.0
    %326 = vmatpush.msra.mxu0 0.0
    %327 = vmatpush.msra.mxu0 0.0
    %328 = vmatpush.msra.mxu0 0.0
    %329 = vmatpush.msra.mxu0 0.0
    %330 = vmatpush.msra.mxu0 0.0
    %331 = vmatpush.msra.mxu0 0.0
    %332 = vmatpush.msra.mxu0 0.0
    %v333 = vand.u32 %v154, 4294901760
    %334 = vmatpush.msra.mxu0 %v333
    %v335 = vand.u32 %v143, 4294901760
    %336 = vmatpush.msra.mxu0 %v335
    %v337 = vand.u32 %v147, 4294901760
    %338 = vmatmul.f32.gmra.mxu0 %v337
    %v339 = vpop.f32.mrf.mxu0
    %v340 = vadd.f32 %v313, %v339
    %v341 = vand.u32 %v150, 4294901760
    %342 = vmatmul.f32.gmra.mxu0 %v341
    %v343 = vpop.f32.mrf.mxu0
    %v344 = vadd.f32 %v317, %v343
    %345 = vdwg.mxu0
    %v346 = vand.u32 %v124, 4294901760
    %347 = vmatpush.msra.mxu0 %v346
    %v348 = vand.u32 %v123, 4294901760
    %349 = vmatpush.msra.mxu0 %v348
    %v350 = vand.u32 %v122, 4294901760
    %351 = vmatpush.msra.mxu0 %v350
    %v352 = vand.u32 %v121, 4294901760
    %353 = vmatpush.msra.mxu0 %v352
    %v354 = vand.u32 %v120, 4294901760
    %355 = vmatpush.msra.mxu0 %v354
    %v356 = vand.u32 %v119, 4294901760
    %357 = vmatpush.msra.mxu0 %v356
    %v358 = vand.u32 %v118, 4294901760
    %359 = vmatpush.msra.mxu0 %v358
    %v360 = vand.u32 %v117, 4294901760
    %361 = vmatpush.msra.mxu0 %v360
    %v362 = vand.u32 %v116, 4294901760
    %363 = vmatpush.msra.mxu0 %v362
    %v364 = vand.u32 %v115, 4294901760
    %365 = vmatpush.msra.mxu0 %v364
    %v366 = vand.u32 %v114, 4294901760
    %367 = vmatpush.msra.mxu0 %v366
    %v368 = vand.u32 %v113, 4294901760
    %369 = vmatpush.msra.mxu0 %v368
    %v370 = vand.u32 %v112, 4294901760
    %371 = vmatpush.msra.mxu0 %v370
    %v372 = vand.u32 %v111, 4294901760
    %373 = vmatpush.msra.mxu0 %v372
    %v374 = vand.u32 %v110, 4294901760
    %375 = vmatpush.msra.mxu0 %v374
    %v376 = vand.u32 %v109, 4294901760
    %377 = vmatpush.msra.mxu0 %v376
    %v378 = vand.u32 %v105, 4294901760
    %v379 = vsub.f32 %v105, %v378
    %v380 = vand.u32 %v379, 4294901760
    %v381 = vsub.f32 %v379, %v380
    %v382 = vand.u32 %v381, 4294901760
    %383 = vmatmul.f32.gmra.mxu0 %v382
    %v384 = vpop.f32.mrf.mxu0
    %v385 = vadd.f32 %v340, %v384
    %v386 = vand.u32 %v107, 4294901760
    %v387 = vsub.f32 %v107, %v386
    %v388 = vand.u32 %v387, 4294901760
    %v389 = vsub.f32 %v387, %v388
    %v390 = vand.u32 %v389, 4294901760
    %391 = vmatmul.f32.gmra.mxu0 %v390
    %v392 = vpop.f32.mrf.mxu0
    %v393 = vadd.f32 %v344, %v392
    %394 = vdwg.mxu0
    %v395 = vand.u32 %v124, 4294901760
    %v396 = vsub.f32 %v124, %v395
    %v397 = vand.u32 %v396, 4294901760
    %v398 = vsub.f32 %v396, %v397
    %v399 = vand.u32 %v398, 4294901760
    %400 = vmatpush.msra.mxu0 %v399
    %v401 = vand.u32 %v123, 4294901760
    %v402 = vsub.f32 %v123, %v401
    %v403 = vand.u32 %v402, 4294901760
    %v404 = vsub.f32 %v402, %v403
    %v405 = vand.u32 %v404, 4294901760
    %406 = vmatpush.msra.mxu0 %v405
    %v407 = vand.u32 %v122, 4294901760
    %v408 = vsub.f32 %v122, %v407
    %v409 = vand.u32 %v408, 4294901760
    %v410 = vsub.f32 %v408, %v409
    %v411 = vand.u32 %v410, 4294901760
    %412 = vmatpush.msra.mxu0 %v411
    %v413 = vand.u32 %v121, 4294901760
    %v414 = vsub.f32 %v121, %v413
    %v415 = vand.u32 %v414, 4294901760
    %v416 = vsub.f32 %v414, %v415
    %v417 = vand.u32 %v416, 4294901760
    %418 = vmatpush.msra.mxu0 %v417
    %v419 = vand.u32 %v120, 4294901760
    %v420 = vsub.f32 %v120, %v419
    %v421 = vand.u32 %v420, 4294901760
    %v422 = vsub.f32 %v420, %v421
    %v423 = vand.u32 %v422, 4294901760
    %424 = vmatpush.msra.mxu0 %v423
    %v425 = vand.u32 %v119, 4294901760
    %v426 = vsub.f32 %v119, %v425
    %v427 = vand.u32 %v426, 4294901760
    %v428 = vsub.f32 %v426, %v427
    %v429 = vand.u32 %v428, 4294901760
    %430 = vmatpush.msra.mxu0 %v429
    %v431 = vand.u32 %v118, 4294901760
    %v432 = vsub.f32 %v118, %v431
    %v433 = vand.u32 %v432, 4294901760
    %v434 = vsub.f32 %v432, %v433
    %v435 = vand.u32 %v434, 4294901760
    %436 = vmatpush.msra.mxu0 %v435
    %v437 = vand.u32 %v117, 4294901760
    %v438 = vsub.f32 %v117, %v437
    %v439 = vand.u32 %v438, 4294901760
    %v440 = vsub.f32 %v438, %v439
    %v441 = vand.u32 %v440, 4294901760
    %442 = vmatpush.msra.mxu0 %v441
    %v443 = vand.u32 %v116, 4294901760
    %v444 = vsub.f32 %v116, %v443
    %v445 = vand.u32 %v444, 4294901760
    %v446 = vsub.f32 %v444, %v445
    %v447 = vand.u32 %v446, 4294901760
    %448 = vmatpush.msra.mxu0 %v447
    %v449 = vand.u32 %v115, 4294901760
    %v450 = vsub.f32 %v115, %v449
    %v451 = vand.u32 %v450, 4294901760
    %v452 = vsub.f32 %v450, %v451
    %v453 = vand.u32 %v452, 4294901760
    %454 = vmatpush.msra.mxu0 %v453
    %v455 = vand.u32 %v114, 4294901760
    %v456 = vsub.f32 %v114, %v455
    %v457 = vand.u32 %v456, 4294901760
    %v458 = vsub.f32 %v456, %v457
    %v459 = vand.u32 %v458, 4294901760
    %460 = vmatpush.msra.mxu0 %v459
    %v461 = vand.u32 %v113, 4294901760
    %v462 = vsub.f32 %v113, %v461
    %v463 = vand.u32 %v462, 4294901760
    %v464 = vsub.f32 %v462, %v463
    %v465 = vand.u32 %v464, 4294901760
    %466 = vmatpush.msra.mxu0 %v465
    %v467 = vand.u32 %v112, 4294901760
    %v468 = vsub.f32 %v112, %v467
    %v469 = vand.u32 %v468, 4294901760
    %v470 = vsub.f32 %v468, %v469
    %v471 = vand.u32 %v470, 4294901760
    %472 = vmatpush.msra.mxu0 %v471
    %v473 = vand.u32 %v111, 4294901760
    %v474 = vsub.f32 %v111, %v473
    %v475 = vand.u32 %v474, 4294901760
    %v476 = vsub.f32 %v474, %v475
    %v477 = vand.u32 %v476, 4294901760
    %478 = vmatpush.msra.mxu0 %v477
    %v479 = vand.u32 %v110, 4294901760
    %v480 = vsub.f32 %v110, %v479
    %v481 = vand.u32 %v480, 4294901760
    %v482 = vsub.f32 %v480, %v481
    %v483 = vand.u32 %v482, 4294901760
    %484 = vmatpush.msra.mxu0 %v483
    %v485 = vand.u32 %v109, 4294901760
    %v486 = vsub.f32 %v109, %v485
    %v487 = vand.u32 %v486, 4294901760
    %v488 = vsub.f32 %v486, %v487
    %v489 = vand.u32 %v488, 4294901760
    %490 = vmatpush.msra.mxu0 %v489
    %v491 = vand.u32 %v105, 4294901760
    %492 = vmatmul.f32.gmra.mxu0 %v491
    %v493 = vpop.f32.mrf.mxu0
    %v494 = vadd.f32 %v385, %v493
    %v495 = vand.u32 %v107, 4294901760
    %496 = vmatmul.f32.gmra.mxu0 %v495
    %v497 = vpop.f32.mrf.mxu0
    %v498 = vadd.f32 %v393, %v497
    %499 = vdwg.mxu0
    %v500 = vand.u32 %v124, 4294901760
    %v501 = vsub.f32 %v124, %v500
    %502 = vmatpush.msra.mxu0 %v501
    %v503 = vand.u32 %v123, 4294901760
    %v504 = vsub.f32 %v123, %v503
    %505 = vmatpush.msra.mxu0 %v504
    %v506 = vand.u32 %v122, 4294901760
    %v507 = vsub.f32 %v122, %v506
    %508 = vmatpush.msra.mxu0 %v507
    %v509 = vand.u32 %v121, 4294901760
    %v510 = vsub.f32 %v121, %v509
    %511 = vmatpush.msra.mxu0 %v510
    %v512 = vand.u32 %v120, 4294901760
    %v513 = vsub.f32 %v120, %v512
    %514 = vmatpush.msra.mxu0 %v513
    %v515 = vand.u32 %v119, 4294901760
    %v516 = vsub.f32 %v119, %v515
    %517 = vmatpush.msra.mxu0 %v516
    %v518 = vand.u32 %v118, 4294901760
    %v519 = vsub.f32 %v118, %v518
    %520 = vmatpush.msra.mxu0 %v519
    %v521 = vand.u32 %v117, 4294901760
    %v522 = vsub.f32 %v117, %v521
    %523 = vmatpush.msra.mxu0 %v522
    %v524 = vand.u32 %v116, 4294901760
    %v525 = vsub.f32 %v116, %v524
    %526 = vmatpush.msra.mxu0 %v525
    %v527 = vand.u32 %v115, 4294901760
    %v528 = vsub.f32 %v115, %v527
    %529 = vmatpush.msra.mxu0 %v528
    %v530 = vand.u32 %v114, 4294901760
    %v531 = vsub.f32 %v114, %v530
    %532 = vmatpush.msra.mxu0 %v531
    %v533 = vand.u32 %v113, 4294901760
    %v534 = vsub.f32 %v113, %v533
    %535 = vmatpush.msra.mxu0 %v534
    %v536 = vand.u32 %v112, 4294901760
    %v537 = vsub.f32 %v112, %v536
    %538 = vmatpush.msra.mxu0 %v537
    %v539 = vand.u32 %v111, 4294901760
    %v540 = vsub.f32 %v111, %v539
    %541 = vmatpush.msra.mxu0 %v540
    %v542 = vand.u32 %v110, 4294901760
    %v543 = vsub.f32 %v110, %v542
    %544 = vmatpush.msra.mxu0 %v543
    %v545 = vand.u32 %v109, 4294901760
    %v546 = vsub.f32 %v109, %v545
    %547 = vmatpush.msra.mxu0 %v546
    %v548 = vand.u32 %v105, 4294901760
    %v549 = vsub.f32 %v105, %v548
    %550 = vmatmul.f32.gmra.mxu0 %v549
    %v551 = vpop.f32.mrf.mxu0
    %v552 = vadd.f32 %v494, %v551
    %v553 = vand.u32 %v107, 4294901760
    %v554 = vsub.f32 %v107, %v553
    %555 = vmatmul.f32.gmra.mxu0 %v554
    %v556 = vpop.f32.mrf.mxu0
    %v557 = vadd.f32 %v498, %v556
    %558 = vdwg.mxu0
    %v559 = vand.u32 %v124, 4294901760
    %560 = vmatpush.msra.mxu0 %v559
    %v561 = vand.u32 %v123, 4294901760
    %562 = vmatpush.msra.mxu0 %v561
    %v563 = vand.u32 %v122, 4294901760
    %564 = vmatpush.msra.mxu0 %v563
    %v565 = vand.u32 %v121, 4294901760
    %566 = vmatpush.msra.mxu0 %v565
    %v567 = vand.u32 %v120, 4294901760
    %568 = vmatpush.msra.mxu0 %v567
    %v569 = vand.u32 %v119, 4294901760
    %570 = vmatpush.msra.mxu0 %v569
    %v571 = vand.u32 %v118, 4294901760
    %572 = vmatpush.msra.mxu0 %v571
    %v573 = vand.u32 %v117, 4294901760
    %574 = vmatpush.msra.mxu0 %v573
    %v575 = vand.u32 %v116, 4294901760
    %576 = vmatpush.msra.mxu0 %v575
    %v577 = vand.u32 %v115, 4294901760
    %578 = vmatpush.msra.mxu0 %v577
    %v579 = vand.u32 %v114, 4294901760
    %580 = vmatpush.msra.mxu0 %v579
    %v581 = vand.u32 %v113, 4294901760
    %582 = vmatpush.msra.mxu0 %v581
    %v583 = vand.u32 %v112, 4294901760
    %584 = vmatpush.msra.mxu0 %v583
    %v585 = vand.u32 %v111, 4294901760
    %586 = vmatpush.msra.mxu0 %v585
    %v587 = vand.u32 %v110, 4294901760
    %588 = vmatpush.msra.mxu0 %v587
    %v589 = vand.u32 %v109, 4294901760
    %590 = vmatpush.msra.mxu0 %v589
    %v591 = vand.u32 %v105, 4294901760
    %v592 = vsub.f32 %v105, %v591
    %v593 = vand.u32 %v592, 4294901760
    %594 = vmatmul.f32.gmra.mxu0 %v593
    %v595 = vpop.f32.mrf.mxu0
    %v596 = vadd.f32 %v552, %v595
    %v597 = vand.u32 %v107, 4294901760
    %v598 = vsub.f32 %v107, %v597
    %v599 = vand.u32 %v598, 4294901760
    %600 = vmatmul.f32.gmra.mxu0 %v599
    %v601 = vpop.f32.mrf.mxu0
    %v602 = vadd.f32 %v557, %v601
    %603 = vdwg.mxu0
    %v604 = vand.u32 %v124, 4294901760
    %v605 = vsub.f32 %v124, %v604
    %v606 = vand.u32 %v605, 4294901760
    %607 = vmatpush.msra.mxu0 %v606
    %v608 = vand.u32 %v123, 4294901760
    %v609 = vsub.f32 %v123, %v608
    %v610 = vand.u32 %v609, 4294901760
    %611 = vmatpush.msra.mxu0 %v610
    %v612 = vand.u32 %v122, 4294901760
    %v613 = vsub.f32 %v122, %v612
    %v614 = vand.u32 %v613, 4294901760
    %615 = vmatpush.msra.mxu0 %v614
    %v616 = vand.u32 %v121, 4294901760
    %v617 = vsub.f32 %v121, %v616
    %v618 = vand.u32 %v617, 4294901760
    %619 = vmatpush.msra.mxu0 %v618
    %v620 = vand.u32 %v120, 4294901760
    %v621 = vsub.f32 %v120, %v620
    %v622 = vand.u32 %v621, 4294901760
    %623 = vmatpush.msra.mxu0 %v622
    %v624 = vand.u32 %v119, 4294901760
    %v625 = vsub.f32 %v119, %v624
    %v626 = vand.u32 %v625, 4294901760
    %627 = vmatpush.msra.mxu0 %v626
    %v628 = vand.u32 %v118, 4294901760
    %v629 = vsub.f32 %v118, %v628
    %v630 = vand.u32 %v629, 4294901760
    %631 = vmatpush.msra.mxu0 %v630
    %v632 = vand.u32 %v117, 4294901760
    %v633 = vsub.f32 %v117, %v632
    %v634 = vand.u32 %v633, 4294901760
    %635 = vmatpush.msra.mxu0 %v634
    %v636 = vand.u32 %v116, 4294901760
    %v637 = vsub.f32 %v116, %v636
    %v638 = vand.u32 %v637, 4294901760
    %639 = vmatpush.msra.mxu0 %v638
    %v640 = vand.u32 %v115, 4294901760
    %v641 = vsub.f32 %v115, %v640
    %v642 = vand.u32 %v641, 4294901760
    %643 = vmatpush.msra.mxu0 %v642
    %v644 = vand.u32 %v114, 4294901760
    %v645 = vsub.f32 %v114, %v644
    %v646 = vand.u32 %v645, 4294901760
    %647 = vmatpush.msra.mxu0 %v646
    %v648 = vand.u32 %v113, 4294901760
    %v649 = vsub.f32 %v113, %v648
    %v650 = vand.u32 %v649, 4294901760
    %651 = vmatpush.msra.mxu0 %v650
    %v652 = vand.u32 %v112, 4294901760
    %v653 = vsub.f32 %v112, %v652
    %v654 = vand.u32 %v653, 4294901760
    %655 = vmatpush.msra.mxu0 %v654
    %v656 = vand.u32 %v111, 4294901760
    %v657 = vsub.f32 %v111, %v656
    %v658 = vand.u32 %v657, 4294901760
    %659 = vmatpush.msra.mxu0 %v658
    %v660 = vand.u32 %v110, 4294901760
    %v661 = vsub.f32 %v110, %v660
    %v662 = vand.u32 %v661, 4294901760
    %663 = vmatpush.msra.mxu0 %v662
    %v664 = vand.u32 %v109, 4294901760
    %v665 = vsub.f32 %v109, %v664
    %v666 = vand.u32 %v665, 4294901760
    %667 = vmatpush.msra.mxu0 %v666
    %v668 = vand.u32 %v105, 4294901760
    %669 = vmatmul.f32.gmra.mxu0 %v668
    %v670 = vpop.f32.mrf.mxu0
    %v671 = vadd.f32 %v596, %v670
    %v672 = vand.u32 %v107, 4294901760
    %673 = vmatmul.f32.gmra.mxu0 %v672
    %v674 = vpop.f32.mrf.mxu0
    %v675 = vadd.f32 %v602, %v674
    %676 = vdwg.mxu0
    %v677 = vand.u32 %v124, 4294901760
    %678 = vmatpush.msra.mxu0 %v677
    %v679 = vand.u32 %v123, 4294901760
    %680 = vmatpush.msra.mxu0 %v679
    %v681 = vand.u32 %v122, 4294901760
    %682 = vmatpush.msra.mxu0 %v681
    %v683 = vand.u32 %v121, 4294901760
    %684 = vmatpush.msra.mxu0 %v683
    %v685 = vand.u32 %v120, 4294901760
    %686 = vmatpush.msra.mxu0 %v685
    %v687 = vand.u32 %v119, 4294901760
    %688 = vmatpush.msra.mxu0 %v687
    %v689 = vand.u32 %v118, 4294901760
    %690 = vmatpush.msra.mxu0 %v689
    %v691 = vand.u32 %v117, 4294901760
    %692 = vmatpush.msra.mxu0 %v691
    %v693 = vand.u32 %v116, 4294901760
    %694 = vmatpush.msra.mxu0 %v693
    %v695 = vand.u32 %v115, 4294901760
    %696 = vmatpush.msra.mxu0 %v695
    %v697 = vand.u32 %v114, 4294901760
    %698 = vmatpush.msra.mxu0 %v697
    %v699 = vand.u32 %v113, 4294901760
    %700 = vmatpush.msra.mxu0 %v699
    %v701 = vand.u32 %v112, 4294901760
    %702 = vmatpush.msra.mxu0 %v701
    %v703 = vand.u32 %v111, 4294901760
    %704 = vmatpush.msra.mxu0 %v703
    %v705 = vand.u32 %v110, 4294901760
    %706 = vmatpush.msra.mxu0 %v705
    %v707 = vand.u32 %v109, 4294901760
    %708 = vmatpush.msra.mxu0 %v707
    %v709 = vand.u32 %v105, 4294901760
    %710 = vmatmul.f32.gmra.mxu0 %v709
    %v711 = vpop.f32.mrf.mxu0
    %v712 = vadd.f32 %v671, %v711
    %v713 = vand.u32 %v107, 4294901760
    %714 = vmatmul.f32.gmra.mxu0 %v713
    %v715 = vpop.f32.mrf.mxu0
    %v716 = vadd.f32 %v675, %v715
    %717 = vdwg.mxu0
    %v718 = vand.u32 %v140, 4294901760
    %719 = vmatpush.msra.mxu0 %v718
    %v720 = vand.u32 %v139, 4294901760
    %721 = vmatpush.msra.mxu0 %v720
    %v722 = vand.u32 %v138, 4294901760
    %723 = vmatpush.msra.mxu0 %v722
    %v724 = vand.u32 %v137, 4294901760
    %725 = vmatpush.msra.mxu0 %v724
    %v726 = vand.u32 %v136, 4294901760
    %727 = vmatpush.msra.mxu0 %v726
    %v728 = vand.u32 %v135, 4294901760
    %729 = vmatpush.msra.mxu0 %v728
    %v730 = vand.u32 %v134, 4294901760
    %731 = vmatpush.msra.mxu0 %v730
    %v732 = vand.u32 %v133, 4294901760
    %733 = vmatpush.msra.mxu0 %v732
    %v734 = vand.u32 %v132, 4294901760
    %735 = vmatpush.msra.mxu0 %v734
    %v736 = vand.u32 %v131, 4294901760
    %737 = vmatpush.msra.mxu0 %v736
    %v738 = vand.u32 %v130, 4294901760
    %739 = vmatpush.msra.mxu0 %v738
    %v740 = vand.u32 %v129, 4294901760
    %741 = vmatpush.msra.mxu0 %v740
    %v742 = vand.u32 %v128, 4294901760
    %743 = vmatpush.msra.mxu0 %v742
    %v744 = vand.u32 %v127, 4294901760
    %745 = vmatpush.msra.mxu0 %v744
    %v746 = vand.u32 %v126, 4294901760
    %747 = vmatpush.msra.mxu0 %v746
    %v748 = vand.u32 %v125, 4294901760
    %749 = vmatpush.msra.mxu0 %v748
    %v750 = vand.u32 %v106, 4294901760
    %v751 = vsub.f32 %v106, %v750
    %v752 = vand.u32 %v751, 4294901760
    %v753 = vsub.f32 %v751, %v752
    %v754 = vand.u32 %v753, 4294901760
    %755 = vmatmul.f32.gmra.mxu0 %v754
    %v756 = vpop.f32.mrf.mxu0
    %v757 = vadd.f32 %v712, %v756
    %v758 = vand.u32 %v108, 4294901760
    %v759 = vsub.f32 %v108, %v758
    %v760 = vand.u32 %v759, 4294901760
    %v761 = vsub.f32 %v759, %v760
    %v762 = vand.u32 %v761, 4294901760
    %763 = vmatmul.f32.gmra.mxu0 %v762
    %v764 = vpop.f32.mrf.mxu0
    %v765 = vadd.f32 %v716, %v764
    %766 = vdwg.mxu0
    %v767 = vand.u32 %v140, 4294901760
    %v768 = vsub.f32 %v140, %v767
    %v769 = vand.u32 %v768, 4294901760
    %v770 = vsub.f32 %v768, %v769
    %v771 = vand.u32 %v770, 4294901760
    %772 = vmatpush.msra.mxu0 %v771
    %v773 = vand.u32 %v139, 4294901760
    %v774 = vsub.f32 %v139, %v773
    %v775 = vand.u32 %v774, 4294901760
    %v776 = vsub.f32 %v774, %v775
    %v777 = vand.u32 %v776, 4294901760
    %778 = vmatpush.msra.mxu0 %v777
    %v779 = vand.u32 %v138, 4294901760
    %v780 = vsub.f32 %v138, %v779
    %v781 = vand.u32 %v780, 4294901760
    %v782 = vsub.f32 %v780, %v781
    %v783 = vand.u32 %v782, 4294901760
    %784 = vmatpush.msra.mxu0 %v783
    %v785 = vand.u32 %v137, 4294901760
    %v786 = vsub.f32 %v137, %v785
    %v787 = vand.u32 %v786, 4294901760
    %v788 = vsub.f32 %v786, %v787
    %v789 = vand.u32 %v788, 4294901760
    %790 = vmatpush.msra.mxu0 %v789
    %v791 = vand.u32 %v136, 4294901760
    %v792 = vsub.f32 %v136, %v791
    %v793 = vand.u32 %v792, 4294901760
    %v794 = vsub.f32 %v792, %v793
    %v795 = vand.u32 %v794, 4294901760
    %796 = vmatpush.msra.mxu0 %v795
    %v797 = vand.u32 %v135, 4294901760
    %v798 = vsub.f32 %v135, %v797
    %v799 = vand.u32 %v798, 4294901760
    %v800 = vsub.f32 %v798, %v799
    %v801 = vand.u32 %v800, 4294901760
    %802 = vmatpush.msra.mxu0 %v801
    %v803 = vand.u32 %v134, 4294901760
    %v804 = vsub.f32 %v134, %v803
    %v805 = vand.u32 %v804, 4294901760
    %v806 = vsub.f32 %v804, %v805
    %v807 = vand.u32 %v806, 4294901760
    %808 = vmatpush.msra.mxu0 %v807
    %v809 = vand.u32 %v133, 4294901760
    %v810 = vsub.f32 %v133, %v809
    %v811 = vand.u32 %v810, 4294901760
    %v812 = vsub.f32 %v810, %v811
    %v813 = vand.u32 %v812, 4294901760
    %814 = vmatpush.msra.mxu0 %v813
    %v815 = vand.u32 %v132, 4294901760
    %v816 = vsub.f32 %v132, %v815
    %v817 = vand.u32 %v816, 4294901760
    %v818 = vsub.f32 %v816, %v817
    %v819 = vand.u32 %v818, 4294901760
    %820 = vmatpush.msra.mxu0 %v819
    %v821 = vand.u32 %v131, 4294901760
    %v822 = vsub.f32 %v131, %v821
    %v823 = vand.u32 %v822, 4294901760
    %v824 = vsub.f32 %v822, %v823
    %v825 = vand.u32 %v824, 4294901760
    %826 = vmatpush.msra.mxu0 %v825
    %v827 = vand.u32 %v130, 4294901760
    %v828 = vsub.f32 %v130, %v827
    %v829 = vand.u32 %v828, 4294901760
    %v830 = vsub.f32 %v828, %v829
    %v831 = vand.u32 %v830, 4294901760
    %832 = vmatpush.msra.mxu0 %v831
    %v833 = vand.u32 %v129, 4294901760
    %v834 = vsub.f32 %v129, %v833
    %v835 = vand.u32 %v834, 4294901760
    %v836 = vsub.f32 %v834, %v835
    %v837 = vand.u32 %v836, 4294901760
    %838 = vmatpush.msra.mxu0 %v837
    %v839 = vand.u32 %v128, 4294901760
    %v840 = vsub.f32 %v128, %v839
    %v841 = vand.u32 %v840, 4294901760
    %v842 = vsub.f32 %v840, %v841
    %v843 = vand.u32 %v842, 4294901760
    %844 = vmatpush.msra.mxu0 %v843
    %v845 = vand.u32 %v127, 4294901760
    %v846 = vsub.f32 %v127, %v845
    %v847 = vand.u32 %v846, 4294901760
    %v848 = vsub.f32 %v846, %v847
    %v849 = vand.u32 %v848, 4294901760
    %850 = vmatpush.msra.mxu0 %v849
    %v851 = vand.u32 %v126, 4294901760
    %v852 = vsub.f32 %v126, %v851
    %v853 = vand.u32 %v852, 4294901760
    %v854 = vsub.f32 %v852, %v853
    %v855 = vand.u32 %v854, 4294901760
    %856 = vmatpush.msra.mxu0 %v855
    %v857 = vand.u32 %v125, 4294901760
    %v858 = vsub.f32 %v125, %v857
    %v859 = vand.u32 %v858, 4294901760
    %v860 = vsub.f32 %v858, %v859
    %v861 = vand.u32 %v860, 4294901760
    %862 = vmatpush.msra.mxu0 %v861
    %v863 = vand.u32 %v106, 4294901760
    %864 = vmatmul.f32.gmra.mxu0 %v863
    %v865 = vpop.f32.mrf.mxu0
    %v866 = vadd.f32 %v757, %v865
    %v867 = vand.u32 %v108, 4294901760
    %868 = vmatmul.f32.gmra.mxu0 %v867
    %v869 = vpop.f32.mrf.mxu0
    %v870 = vadd.f32 %v765, %v869
    %871 = vdwg.mxu0
    %v872 = vand.u32 %v140, 4294901760
    %v873 = vsub.f32 %v140, %v872
    %874 = vmatpush.msra.mxu0 %v873
    %v875 = vand.u32 %v139, 4294901760
    %v876 = vsub.f32 %v139, %v875
    %877 = vmatpush.msra.mxu0 %v876
    %v878 = vand.u32 %v138, 4294901760
    %v879 = vsub.f32 %v138, %v878
    %880 = vmatpush.msra.mxu0 %v879
    %v881 = vand.u32 %v137, 4294901760
    %v882 = vsub.f32 %v137, %v881
    %883 = vmatpush.msra.mxu0 %v882
    %v884 = vand.u32 %v136, 4294901760
    %v885 = vsub.f32 %v136, %v884
    %886 = vmatpush.msra.mxu0 %v885
    %v887 = vand.u32 %v135, 4294901760
    %v888 = vsub.f32 %v135, %v887
    %889 = vmatpush.msra.mxu0 %v888
    %v890 = vand.u32 %v134, 4294901760
    %v891 = vsub.f32 %v134, %v890
    %892 = vmatpush.msra.mxu0 %v891
    %v893 = vand.u32 %v133, 4294901760
    %v894 = vsub.f32 %v133, %v893
    %895 = vmatpush.msra.mxu0 %v894
    %v896 = vand.u32 %v132, 4294901760
    %v897 = vsub.f32 %v132, %v896
    %898 = vmatpush.msra.mxu0 %v897
    %v899 = vand.u32 %v131, 4294901760
    %v900 = vsub.f32 %v131, %v899
    %901 = vmatpush.msra.mxu0 %v900
    %v902 = vand.u32 %v130, 4294901760
    %v903 = vsub.f32 %v130, %v902
    %904 = vmatpush.msra.mxu0 %v903
    %v905 = vand.u32 %v129, 4294901760
    %v906 = vsub.f32 %v129, %v905
    %907 = vmatpush.msra.mxu0 %v906
    %v908 = vand.u32 %v128, 4294901760
    %v909 = vsub.f32 %v128, %v908
    %910 = vmatpush.msra.mxu0 %v909
    %v911 = vand.u32 %v127, 4294901760
    %v912 = vsub.f32 %v127, %v911
    %913 = vmatpush.msra.mxu0 %v912
    %v914 = vand.u32 %v126, 4294901760
    %v915 = vsub.f32 %v126, %v914
    %916 = vmatpush.msra.mxu0 %v915
    %v917 = vand.u32 %v125, 4294901760
    %v918 = vsub.f32 %v125, %v917
    %919 = vmatpush.msra.mxu0 %v918
    %v920 = vand.u32 %v106, 4294901760
    %v921 = vsub.f32 %v106, %v920
    %922 = vmatmul.f32.gmra.mxu0 %v921
    %v923 = vpop.f32.mrf.mxu0
    %v924 = vadd.f32 %v866, %v923
    %v925 = vand.u32 %v108, 4294901760
    %v926 = vsub.f32 %v108, %v925
    %927 = vmatmul.f32.gmra.mxu0 %v926
    %v928 = vpop.f32.mrf.mxu0
    %v929 = vadd.f32 %v870, %v928
    %930 = vdwg.mxu0
    %v931 = vand.u32 %v140, 4294901760
    %932 = vmatpush.msra.mxu0 %v931
    %v933 = vand.u32 %v139, 4294901760
    %934 = vmatpush.msra.mxu0 %v933
    %v935 = vand.u32 %v138, 4294901760
    %936 = vmatpush.msra.mxu0 %v935
    %v937 = vand.u32 %v137, 4294901760
    %938 = vmatpush.msra.mxu0 %v937
    %v939 = vand.u32 %v136, 4294901760
    %940 = vmatpush.msra.mxu0 %v939
    %v941 = vand.u32 %v135, 4294901760
    %942 = vmatpush.msra.mxu0 %v941
    %v943 = vand.u32 %v134, 4294901760
    %944 = vmatpush.msra.mxu0 %v943
    %v945 = vand.u32 %v133, 4294901760
    %946 = vmatpush.msra.mxu0 %v945
    %v947 = vand.u32 %v132, 4294901760
    %948 = vmatpush.msra.mxu0 %v947
    %v949 = vand.u32 %v131, 4294901760
    %950 = vmatpush.msra.mxu0 %v949
    %v951 = vand.u32 %v130, 4294901760
    %952 = vmatpush.msra.mxu0 %v951
    %v953 = vand.u32 %v129, 4294901760
    %954 = vmatpush.msra.mxu0 %v953
    %v955 = vand.u32 %v128, 4294901760
    %956 = vmatpush.msra.mxu0 %v955
    %v957 = vand.u32 %v127, 4294901760
    %958 = vmatpush.msra.mxu0 %v957
    %v959 = vand.u32 %v126, 4294901760
    %960 = vmatpush.msra.mxu0 %v959
    %v961 = vand.u32 %v125, 4294901760
    %962 = vmatpush.msra.mxu0 %v961
    %v963 = vand.u32 %v106, 4294901760
    %v964 = vsub.f32 %v106, %v963
    %v965 = vand.u32 %v964, 4294901760
    %966 = vmatmul.f32.gmra.mxu0 %v965
    %v967 = vpop.f32.mrf.mxu0
    %v968 = vadd.f32 %v924, %v967
    %v969 = vand.u32 %v108, 4294901760
    %v970 = vsub.f32 %v108, %v969
    %v971 = vand.u32 %v970, 4294901760
    %972 = vmatmul.f32.gmra.mxu0 %v971
    %v973 = vpop.f32.mrf.mxu0
    %v974 = vadd.f32 %v929, %v973
    %975 = vdwg.mxu0
    %v976 = vand.u32 %v140, 4294901760
    %v977 = vsub.f32 %v140, %v976
    %v978 = vand.u32 %v977, 4294901760
    %979 = vmatpush.msra.mxu0 %v978
    %v980 = vand.u32 %v139, 4294901760
    %v981 = vsub.f32 %v139, %v980
    %v982 = vand.u32 %v981, 4294901760
    %983 = vmatpush.msra.mxu0 %v982
    %v984 = vand.u32 %v138, 4294901760
    %v985 = vsub.f32 %v138, %v984
    %v986 = vand.u32 %v985, 4294901760
    %987 = vmatpush.msra.mxu0 %v986
    %v988 = vand.u32 %v137, 4294901760
    %v989 = vsub.f32 %v137, %v988
    %v990 = vand.u32 %v989, 4294901760
    %991 = vmatpush.msra.mxu0 %v990
    %v992 = vand.u32 %v136, 4294901760
    %v993 = vsub.f32 %v136, %v992
    %v994 = vand.u32 %v993, 4294901760
    %995 = vmatpush.msra.mxu0 %v994
    %v996 = vand.u32 %v135, 4294901760
    %v997 = vsub.f32 %v135, %v996
    %v998 = vand.u32 %v997, 4294901760
    %999 = vmatpush.msra.mxu0 %v998
    %v1000 = vand.u32 %v134, 4294901760
    %v1001 = vsub.f32 %v134, %v1000
    %v1002 = vand.u32 %v1001, 4294901760
    %1003 = vmatpush.msra.mxu0 %v1002
    %v1004 = vand.u32 %v133, 4294901760
    %v1005 = vsub.f32 %v133, %v1004
    %v1006 = vand.u32 %v1005, 4294901760
    %1007 = vmatpush.msra.mxu0 %v1006
    %v1008 = vand.u32 %v132, 4294901760
    %v1009 = vsub.f32 %v132, %v1008
    %v1010 = vand.u32 %v1009, 4294901760
    %1011 = vmatpush.msra.mxu0 %v1010
    %v1012 = vand.u32 %v131, 4294901760
    %v1013 = vsub.f32 %v131, %v1012
    %v1014 = vand.u32 %v1013, 4294901760
    %1015 = vmatpush.msra.mxu0 %v1014
    %v1016 = vand.u32 %v130, 4294901760
    %v1017 = vsub.f32 %v130, %v1016
    %v1018 = vand.u32 %v1017, 4294901760
    %1019 = vmatpush.msra.mxu0 %v1018
    %v1020 = vand.u32 %v129, 4294901760
    %v1021 = vsub.f32 %v129, %v1020
    %v1022 = vand.u32 %v1021, 4294901760
    %1023 = vmatpush.msra.mxu0 %v1022
    %v1024 = vand.u32 %v128, 4294901760
    %v1025 = vsub.f32 %v128, %v1024
    %v1026 = vand.u32 %v1025, 4294901760
    %1027 = vmatpush.msra.mxu0 %v1026
    %v1028 = vand.u32 %v127, 4294901760
    %v1029 = vsub.f32 %v127, %v1028
    %v1030 = vand.u32 %v1029, 4294901760
    %1031 = vmatpush.msra.mxu0 %v1030
    %v1032 = vand.u32 %v126, 4294901760
    %v1033 = vsub.f32 %v126, %v1032
    %v1034 = vand.u32 %v1033, 4294901760
    %1035 = vmatpush.msra.mxu0 %v1034
    %v1036 = vand.u32 %v125, 4294901760
    %v1037 = vsub.f32 %v125, %v1036
    %v1038 = vand.u32 %v1037, 4294901760
    %1039 = vmatpush.msra.mxu0 %v1038
    %v1040 = vand.u32 %v106, 4294901760
    %1041 = vmatmul.f32.gmra.mxu0 %v1040
    %v1042 = vpop.f32.mrf.mxu0
    %v1043 = vadd.f32 %v968, %v1042
    %v1044 = vand.u32 %v108, 4294901760
    %1045 = vmatmul.f32.gmra.mxu0 %v1044
    %v1046 = vpop.f32.mrf.mxu0
    %v1047 = vadd.f32 %v974, %v1046
    %1048 = vdwg.mxu0
    %v1049 = vand.u32 %v140, 4294901760
    %1050 = vmatpush.msra.mxu0 %v1049
    %v1051 = vand.u32 %v139, 4294901760
    %1052 = vmatpush.msra.mxu0 %v1051
    %v1053 = vand.u32 %v138, 4294901760
    %1054 = vmatpush.msra.mxu0 %v1053
    %v1055 = vand.u32 %v137, 4294901760
    %1056 = vmatpush.msra.mxu0 %v1055
    %v1057 = vand.u32 %v136, 4294901760
    %1058 = vmatpush.msra.mxu0 %v1057
    %v1059 = vand.u32 %v135, 4294901760
    %1060 = vmatpush.msra.mxu0 %v1059
    %v1061 = vand.u32 %v134, 4294901760
    %1062 = vmatpush.msra.mxu0 %v1061
    %v1063 = vand.u32 %v133, 4294901760
    %1064 = vmatpush.msra.mxu0 %v1063
    %v1065 = vand.u32 %v132, 4294901760
    %1066 = vmatpush.msra.mxu0 %v1065
    %v1067 = vand.u32 %v131, 4294901760
    %1068 = vmatpush.msra.mxu0 %v1067
    %v1069 = vand.u32 %v130, 4294901760
    %1070 = vmatpush.msra.mxu0 %v1069
    %v1071 = vand.u32 %v129, 4294901760
    %1072 = vmatpush.msra.mxu0 %v1071
    %v1073 = vand.u32 %v128, 4294901760
    %1074 = vmatpush.msra.mxu0 %v1073
    %v1075 = vand.u32 %v127, 4294901760
    %1076 = vmatpush.msra.mxu0 %v1075
    %v1077 = vand.u32 %v126, 4294901760
    %1078 = vmatpush.msra.mxu0 %v1077
    %v1079 = vand.u32 %v125, 4294901760
    %1080 = vmatpush.msra.mxu0 %v1079
    %v1081 = vand.u32 %v106, 4294901760
    %1082 = vmatmul.f32.gmra.mxu0 %v1081
    %v1083 = vpop.f32.mrf.mxu0
    %v1084 = vadd.f32 %v1043, %v1083
    %v1085 = vand.u32 %v108, 4294901760
    %1086 = vmatmul.f32.gmra.mxu0 %v1085
    %v1087 = vpop.f32.mrf.mxu0
    %v1088 = vadd.f32 %v1047, %v1087
    %1089 = vdwg.mxu0
    %v1090 = vld [vmem:[%s4] sm:$0x1]
    %v1092 = vperm.slane %v1090, 0
    %v1094 = vadd.f32 %v1084, %v1092
    %v1095 = vadd.f32 %v1088, %v1092
    %v1096 = vxor.u32 %v1094, 2147483648
    %v1097 = vxor.u32 %v1095, 2147483648
    %v1098 = vmul.f32 %v1096, 1.442695
    %v1099 = vpow.pop %v1098
    %v1100 = vmul.f32 %v1097, 1.442695
    %v1101 = vpow.pop %v1100
    %v1102 = vadd.f32 %v1099, 1.0
    %v1103 = vadd.f32 %v1101, 1.0
    %v1104 = vrcp.pop %v1102
    %v1105 = vmul.f32 %v1102, %v1104
    %v1106 = vsub.f32 1.0, %v1105
    %v1107 = vmul.f32 %v1104, %v1106
    %v1108 = vadd.f32 %v1104, %v1107
    %vm1109 = vweird.f32 %v1102
    %vm1110 = vweird.f32 %v1104
    %vm1111 = vmor %vm1109, %vm1110
    %v1112 = vsel %vm1111, %v1104, %v1108
    %v1113 = vand.u32 2147483647, %v1102
    %vm1114 = vcmp.eq.f32.partialorder %v1113, 8.507059e+37
    %v1115 = vand.u32 %v1102, 2147483648
    %v1116 = vor.u32 1.1754944e-38, %v1115
    %v1117 = vsel %vm1114, %v1116, %v1112
    %v1118 = vmul.f32 1.0, %v1117
    %v1119 = vrcp.pop %v1103
    %v1120 = vmul.f32 %v1103, %v1119
    %v1121 = vsub.f32 1.0, %v1120
    %v1122 = vmul.f32 %v1119, %v1121
    %v1123 = vadd.f32 %v1119, %v1122
    %vm1124 = vweird.f32 %v1103
    %vm1125 = vweird.f32 %v1119
    %vm1126 = vmor %vm1124, %vm1125
    %v1127 = vsel %vm1126, %v1119, %v1123
    %v1128 = vand.u32 2147483647, %v1103
    %vm1129 = vcmp.eq.f32.partialorder %v1128, 8.507059e+37
    %v1130 = vand.u32 %v1103, 2147483648
    %v1131 = vor.u32 1.1754944e-38, %v1130
    %v1132 = vsel %vm1129, %v1131, %v1127
    %v1133 = vmul.f32 1.0, %v1132
    %v1134 = vmul.f32 %v1094, %v1118
    %v1135 = vmul.f32 %v1095, %v1133
    %v1136 = vld [vmem:[#allocation10] sm:$0xff]
    %v1137 = vld [vmem:[#allocation10 + $0x8] sm:$0xff]
    %v1138 = vld [vmem:[#allocation10 + $0x10] sm:$0xff]
    %v1139 = vld [vmem:[#allocation10 + $0x18] sm:$0xff]
    %v1140 = vld [vmem:[#allocation10 + $0x20] sm:$0xff]
    %v1141 = vld [vmem:[#allocation10 + $0x28] sm:$0xff]
    %v1142 = vld [vmem:[#allocation10 + $0x30] sm:$0xff]
    %v1143 = vld [vmem:[#allocation10 + $0x38] sm:$0xff]
    %v1144 = vld [vmem:[#allocation10 + $0x40] sm:$0xff]
    %v1145 = vld [vmem:[#allocation10 + $0x48] sm:$0xff]
    %v1146 = vld [vmem:[#allocation10 + $0x50] sm:$0xff]
    %v1147 = vld [vmem:[#allocation10 + $0x58] sm:$0xff]
    %v1148 = vld [vmem:[#allocation10 + $0x60] sm:$0xff]
    %v1149 = vld [vmem:[#allocation10 + $0x68] sm:$0xff]
    %v1150 = vld [vmem:[#allocation10 + $0x70] sm:$0xff]
    %v1151 = vld [vmem:[#allocation10 + $0x78] sm:$0xff]
    %v1152 = vld [vmem:[%s6] sm:$0x1]
    %v1154 = vperm.slane %v1152, 0
    %v1156 = vand.u32 %v1151, 4294901760
    %1157 = vmatpush.msra.mxu0 %v1156
    %v1158 = vand.u32 %v1150, 4294901760
    %1159 = vmatpush.msra.mxu0 %v1158
    %v1160 = vand.u32 %v1149, 4294901760
    %1161 = vmatpush.msra.mxu0 %v1160
    %v1162 = vand.u32 %v1148, 4294901760
    %1163 = vmatpush.msra.mxu0 %v1162
    %v1164 = vand.u32 %v1147, 4294901760
    %1165 = vmatpush.msra.mxu0 %v1164
    %v1166 = vand.u32 %v1146, 4294901760
    %1167 = vmatpush.msra.mxu0 %v1166
    %v1168 = vand.u32 %v1145, 4294901760
    %1169 = vmatpush.msra.mxu0 %v1168
    %v1170 = vand.u32 %v1144, 4294901760
    %1171 = vmatpush.msra.mxu0 %v1170
    %v1172 = vand.u32 %v1143, 4294901760
    %1173 = vmatpush.msra.mxu0 %v1172
    %v1174 = vand.u32 %v1142, 4294901760
    %1175 = vmatpush.msra.mxu0 %v1174
    %v1176 = vand.u32 %v1141, 4294901760
    %1177 = vmatpush.msra.mxu0 %v1176
    %v1178 = vand.u32 %v1140, 4294901760
    %1179 = vmatpush.msra.mxu0 %v1178
    %v1180 = vand.u32 %v1139, 4294901760
    %1181 = vmatpush.msra.mxu0 %v1180
    %v1182 = vand.u32 %v1138, 4294901760
    %1183 = vmatpush.msra.mxu0 %v1182
    %v1184 = vand.u32 %v1137, 4294901760
    %1185 = vmatpush.msra.mxu0 %v1184
    %v1186 = vand.u32 %v1136, 4294901760
    %1187 = vmatpush.msra.mxu0 %v1186
    %v1188 = vand.u32 %v1134, 4294901760
    %v1189 = vsub.f32 %v1134, %v1188
    %v1190 = vand.u32 %v1189, 4294901760
    %v1191 = vsub.f32 %v1189, %v1190
    %v1192 = vand.u32 %v1191, 4294901760
    %1193 = vmatmul.f32.gmra.mxu0 %v1192
    %v1194 = vpop.f32.mrf.mxu0
    %v1195 = vadd.f32 %v1154, %v1194
    %v1196 = vand.u32 %v1135, 4294901760
    %v1197 = vsub.f32 %v1135, %v1196
    %v1198 = vand.u32 %v1197, 4294901760
    %v1199 = vsub.f32 %v1197, %v1198
    %v1200 = vand.u32 %v1199, 4294901760
    %1201 = vmatmul.f32.gmra.mxu0 %v1200
    %v1202 = vpop.f32.mrf.mxu0
    %v1203 = vadd.f32 %v1154, %v1202
    %1204 = vdwg.mxu0
    %v1205 = vand.u32 %v1151, 4294901760
    %v1206 = vsub.f32 %v1151, %v1205
    %v1207 = vand.u32 %v1206, 4294901760
    %v1208 = vsub.f32 %v1206, %v1207
    %v1209 = vand.u32 %v1208, 4294901760
    %1210 = vmatpush.msra.mxu0 %v1209
    %v1211 = vand.u32 %v1150, 4294901760
    %v1212 = vsub.f32 %v1150, %v1211
    %v1213 = vand.u32 %v1212, 4294901760
    %v1214 = vsub.f32 %v1212, %v1213
    %v1215 = vand.u32 %v1214, 4294901760
    %1216 = vmatpush.msra.mxu0 %v1215
    %v1217 = vand.u32 %v1149, 4294901760
    %v1218 = vsub.f32 %v1149, %v1217
    %v1219 = vand.u32 %v1218, 4294901760
    %v1220 = vsub.f32 %v1218, %v1219
    %v1221 = vand.u32 %v1220, 4294901760
    %1222 = vmatpush.msra.mxu0 %v1221
    %v1223 = vand.u32 %v1148, 4294901760
    %v1224 = vsub.f32 %v1148, %v1223
    %v1225 = vand.u32 %v1224, 4294901760
    %v1226 = vsub.f32 %v1224, %v1225
    %v1227 = vand.u32 %v1226, 4294901760
    %1228 = vmatpush.msra.mxu0 %v1227
    %v1229 = vand.u32 %v1147, 4294901760
    %v1230 = vsub.f32 %v1147, %v1229
    %v1231 = vand.u32 %v1230, 4294901760
    %v1232 = vsub.f32 %v1230, %v1231
    %v1233 = vand.u32 %v1232, 4294901760
    %1234 = vmatpush.msra.mxu0 %v1233
    %v1235 = vand.u32 %v1146, 4294901760
    %v1236 = vsub.f32 %v1146, %v1235
    %v1237 = vand.u32 %v1236, 4294901760
    %v1238 = vsub.f32 %v1236, %v1237
    %v1239 = vand.u32 %v1238, 4294901760
    %1240 = vmatpush.msra.mxu0 %v1239
    %v1241 = vand.u32 %v1145, 4294901760
    %v1242 = vsub.f32 %v1145, %v1241
    %v1243 = vand.u32 %v1242, 4294901760
    %v1244 = vsub.f32 %v1242, %v1243
    %v1245 = vand.u32 %v1244, 4294901760
    %1246 = vmatpush.msra.mxu0 %v1245
    %v1247 = vand.u32 %v1144, 4294901760
    %v1248 = vsub.f32 %v1144, %v1247
    %v1249 = vand.u32 %v1248, 4294901760
    %v1250 = vsub.f32 %v1248, %v1249
    %v1251 = vand.u32 %v1250, 4294901760
    %1252 = vmatpush.msra.mxu0 %v1251
    %v1253 = vand.u32 %v1143, 4294901760
    %v1254 = vsub.f32 %v1143, %v1253
    %v1255 = vand.u32 %v1254, 4294901760
    %v1256 = vsub.f32 %v1254, %v1255
    %v1257 = vand.u32 %v1256, 4294901760
    %1258 = vmatpush.msra.mxu0 %v1257
    %v1259 = vand.u32 %v1142, 4294901760
    %v1260 = vsub.f32 %v1142, %v1259
    %v1261 = vand.u32 %v1260, 4294901760
    %v1262 = vsub.f32 %v1260, %v1261
    %v1263 = vand.u32 %v1262, 4294901760
    %1264 = vmatpush.msra.mxu0 %v1263
    %v1265 = vand.u32 %v1141, 4294901760
    %v1266 = vsub.f32 %v1141, %v1265
    %v1267 = vand.u32 %v1266, 4294901760
    %v1268 = vsub.f32 %v1266, %v1267
    %v1269 = vand.u32 %v1268, 4294901760
    %1270 = vmatpush.msra.mxu0 %v1269
    %v1271 = vand.u32 %v1140, 4294901760
    %v1272 = vsub.f32 %v1140, %v1271
    %v1273 = vand.u32 %v1272, 4294901760
    %v1274 = vsub.f32 %v1272, %v1273
    %v1275 = vand.u32 %v1274, 4294901760
    %1276 = vmatpush.msra.mxu0 %v1275
    %v1277 = vand.u32 %v1139, 4294901760
    %v1278 = vsub.f32 %v1139, %v1277
    %v1279 = vand.u32 %v1278, 4294901760
    %v1280 = vsub.f32 %v1278, %v1279
    %v1281 = vand.u32 %v1280, 4294901760
    %1282 = vmatpush.msra.mxu0 %v1281
    %v1283 = vand.u32 %v1138, 4294901760
    %v1284 = vsub.f32 %v1138, %v1283
    %v1285 = vand.u32 %v1284, 4294901760
    %v1286 = vsub.f32 %v1284, %v1285
    %v1287 = vand.u32 %v1286, 4294901760
    %1288 = vmatpush.msra.mxu0 %v1287
    %v1289 = vand.u32 %v1137, 4294901760
    %v1290 = vsub.f32 %v1137, %v1289
    %v1291 = vand.u32 %v1290, 4294901760
    %v1292 = vsub.f32 %v1290, %v1291
    %v1293 = vand.u32 %v1292, 4294901760
    %1294 = vmatpush.msra.mxu0 %v1293
    %v1295 = vand.u32 %v1136, 4294901760
    %v1296 = vsub.f32 %v1136, %v1295
    %v1297 = vand.u32 %v1296, 4294901760
    %v1298 = vsub.f32 %v1296, %v1297
    %v1299 = vand.u32 %v1298, 4294901760
    %1300 = vmatpush.msra.mxu0 %v1299
    %v1301 = vand.u32 %v1134, 4294901760
    %1302 = vmatmul.f32.gmra.mxu0 %v1301
    %v1303 = vpop.f32.mrf.mxu0
    %v1304 = vadd.f32 %v1195, %v1303
    %v1305 = vand.u32 %v1135, 4294901760
    %1306 = vmatmul.f32.gmra.mxu0 %v1305
    %v1307 = vpop.f32.mrf.mxu0
    %v1308 = vadd.f32 %v1203, %v1307
    %1309 = vdwg.mxu0
    %v1310 = vand.u32 %v1151, 4294901760
    %v1311 = vsub.f32 %v1151, %v1310
    %1312 = vmatpush.msra.mxu0 %v1311
    %v1313 = vand.u32 %v1150, 4294901760
    %v1314 = vsub.f32 %v1150, %v1313
    %1315 = vmatpush.msra.mxu0 %v1314
    %v1316 = vand.u32 %v1149, 4294901760
    %v1317 = vsub.f32 %v1149, %v1316
    %1318 = vmatpush.msra.mxu0 %v1317
    %v1319 = vand.u32 %v1148, 4294901760
    %v1320 = vsub.f32 %v1148, %v1319
    %1321 = vmatpush.msra.mxu0 %v1320
    %v1322 = vand.u32 %v1147, 4294901760
    %v1323 = vsub.f32 %v1147, %v1322
    %1324 = vmatpush.msra.mxu0 %v1323
    %v1325 = vand.u32 %v1146, 4294901760
    %v1326 = vsub.f32 %v1146, %v1325
    %1327 = vmatpush.msra.mxu0 %v1326
    %v1328 = vand.u32 %v1145, 4294901760
    %v1329 = vsub.f32 %v1145, %v1328
    %1330 = vmatpush.msra.mxu0 %v1329
    %v1331 = vand.u32 %v1144, 4294901760
    %v1332 = vsub.f32 %v1144, %v1331
    %1333 = vmatpush.msra.mxu0 %v1332
    %v1334 = vand.u32 %v1143, 4294901760
    %v1335 = vsub.f32 %v1143, %v1334
    %1336 = vmatpush.msra.mxu0 %v1335
    %v1337 = vand.u32 %v1142, 4294901760
    %v1338 = vsub.f32 %v1142, %v1337
    %1339 = vmatpush.msra.mxu0 %v1338
    %v1340 = vand.u32 %v1141, 4294901760
    %v1341 = vsub.f32 %v1141, %v1340
    %1342 = vmatpush.msra.mxu0 %v1341
    %v1343 = vand.u32 %v1140, 4294901760
    %v1344 = vsub.f32 %v1140, %v1343
    %1345 = vmatpush.msra.mxu0 %v1344
    %v1346 = vand.u32 %v1139, 4294901760
    %v1347 = vsub.f32 %v1139, %v1346
    %1348 = vmatpush.msra.mxu0 %v1347
    %v1349 = vand.u32 %v1138, 4294901760
    %v1350 = vsub.f32 %v1138, %v1349
    %1351 = vmatpush.msra.mxu0 %v1350
    %v1352 = vand.u32 %v1137, 4294901760
    %v1353 = vsub.f32 %v1137, %v1352
    %1354 = vmatpush.msra.mxu0 %v1353
    %v1355 = vand.u32 %v1136, 4294901760
    %v1356 = vsub.f32 %v1136, %v1355
    %1357 = vmatpush.msra.mxu0 %v1356
    %v1358 = vand.u32 %v1134, 4294901760
    %v1359 = vsub.f32 %v1134, %v1358
    %1360 = vmatmul.f32.gmra.mxu0 %v1359
    %v1361 = vpop.f32.mrf.mxu0
    %v1362 = vadd.f32 %v1304, %v1361
    %v1363 = vand.u32 %v1135, 4294901760
    %v1364 = vsub.f32 %v1135, %v1363
    %1365 = vmatmul.f32.gmra.mxu0 %v1364
    %v1366 = vpop.f32.mrf.mxu0
    %v1367 = vadd.f32 %v1308, %v1366
    %1368 = vdwg.mxu0
    %v1369 = vand.u32 %v1151, 4294901760
    %1370 = vmatpush.msra.mxu0 %v1369
    %v1371 = vand.u32 %v1150, 4294901760
    %1372 = vmatpush.msra.mxu0 %v1371
    %v1373 = vand.u32 %v1149, 4294901760
    %1374 = vmatpush.msra.mxu0 %v1373
    %v1375 = vand.u32 %v1148, 4294901760
    %1376 = vmatpush.msra.mxu0 %v1375
    %v1377 = vand.u32 %v1147, 4294901760
    %1378 = vmatpush.msra.mxu0 %v1377
    %v1379 = vand.u32 %v1146, 4294901760
    %1380 = vmatpush.msra.mxu0 %v1379
    %v1381 = vand.u32 %v1145, 4294901760
    %1382 = vmatpush.msra.mxu0 %v1381
    %v1383 = vand.u32 %v1144, 4294901760
    %1384 = vmatpush.msra.mxu0 %v1383
    %v1385 = vand.u32 %v1143, 4294901760
    %1386 = vmatpush.msra.mxu0 %v1385
    %v1387 = vand.u32 %v1142, 4294901760
    %1388 = vmatpush.msra.mxu0 %v1387
    %v1389 = vand.u32 %v1141, 4294901760
    %1390 = vmatpush.msra.mxu0 %v1389
    %v1391 = vand.u32 %v1140, 4294901760
    %1392 = vmatpush.msra.mxu0 %v1391
    %v1393 = vand.u32 %v1139, 4294901760
    %1394 = vmatpush.msra.mxu0 %v1393
    %v1395 = vand.u32 %v1138, 4294901760
    %1396 = vmatpush.msra.mxu0 %v1395
    %v1397 = vand.u32 %v1137, 4294901760
    %1398 = vmatpush.msra.mxu0 %v1397
    %v1399 = vand.u32 %v1136, 4294901760
    %1400 = vmatpush.msra.mxu0 %v1399
    %v1401 = vand.u32 %v1134, 4294901760
    %v1402 = vsub.f32 %v1134, %v1401
    %v1403 = vand.u32 %v1402, 4294901760
    %1404 = vmatmul.f32.gmra.mxu0 %v1403
    %v1405 = vpop.f32.mrf.mxu0
    %v1406 = vadd.f32 %v1362, %v1405
    %v1407 = vand.u32 %v1135, 4294901760
    %v1408 = vsub.f32 %v1135, %v1407
    %v1409 = vand.u32 %v1408, 4294901760
    %1410 = vmatmul.f32.gmra.mxu0 %v1409
    %v1411 = vpop.f32.mrf.mxu0
    %v1412 = vadd.f32 %v1367, %v1411
    %1413 = vdwg.mxu0
    %v1414 = vand.u32 %v1151, 4294901760
    %v1415 = vsub.f32 %v1151, %v1414
    %v1416 = vand.u32 %v1415, 4294901760
    %1417 = vmatpush.msra.mxu0 %v1416
    %v1418 = vand.u32 %v1150, 4294901760
    %v1419 = vsub.f32 %v1150, %v1418
    %v1420 = vand.u32 %v1419, 4294901760
    %1421 = vmatpush.msra.mxu0 %v1420
    %v1422 = vand.u32 %v1149, 4294901760
    %v1423 = vsub.f32 %v1149, %v1422
    %v1424 = vand.u32 %v1423, 4294901760
    %1425 = vmatpush.msra.mxu0 %v1424
    %v1426 = vand.u32 %v1148, 4294901760
    %v1427 = vsub.f32 %v1148, %v1426
    %v1428 = vand.u32 %v1427, 4294901760
    %1429 = vmatpush.msra.mxu0 %v1428
    %v1430 = vand.u32 %v1147, 4294901760
    %v1431 = vsub.f32 %v1147, %v1430
    %v1432 = vand.u32 %v1431, 4294901760
    %1433 = vmatpush.msra.mxu0 %v1432
    %v1434 = vand.u32 %v1146, 4294901760
    %v1435 = vsub.f32 %v1146, %v1434
    %v1436 = vand.u32 %v1435, 4294901760
    %1437 = vmatpush.msra.mxu0 %v1436
    %v1438 = vand.u32 %v1145, 4294901760
    %v1439 = vsub.f32 %v1145, %v1438
    %v1440 = vand.u32 %v1439, 4294901760
    %1441 = vmatpush.msra.mxu0 %v1440
    %v1442 = vand.u32 %v1144, 4294901760
    %v1443 = vsub.f32 %v1144, %v1442
    %v1444 = vand.u32 %v1443, 4294901760
    %1445 = vmatpush.msra.mxu0 %v1444
    %v1446 = vand.u32 %v1143, 4294901760
    %v1447 = vsub.f32 %v1143, %v1446
    %v1448 = vand.u32 %v1447, 4294901760
    %1449 = vmatpush.msra.mxu0 %v1448
    %v1450 = vand.u32 %v1142, 4294901760
    %v1451 = vsub.f32 %v1142, %v1450
    %v1452 = vand.u32 %v1451, 4294901760
    %1453 = vmatpush.msra.mxu0 %v1452
    %v1454 = vand.u32 %v1141, 4294901760
    %v1455 = vsub.f32 %v1141, %v1454
    %v1456 = vand.u32 %v1455, 4294901760
    %1457 = vmatpush.msra.mxu0 %v1456
    %v1458 = vand.u32 %v1140, 4294901760
    %v1459 = vsub.f32 %v1140, %v1458
    %v1460 = vand.u32 %v1459, 4294901760
    %1461 = vmatpush.msra.mxu0 %v1460
    %v1462 = vand.u32 %v1139, 4294901760
    %v1463 = vsub.f32 %v1139, %v1462
    %v1464 = vand.u32 %v1463, 4294901760
    %1465 = vmatpush.msra.mxu0 %v1464
    %v1466 = vand.u32 %v1138, 4294901760
    %v1467 = vsub.f32 %v1138, %v1466
    %v1468 = vand.u32 %v1467, 4294901760
    %1469 = vmatpush.msra.mxu0 %v1468
    %v1470 = vand.u32 %v1137, 4294901760
    %v1471 = vsub.f32 %v1137, %v1470
    %v1472 = vand.u32 %v1471, 4294901760
    %1473 = vmatpush.msra.mxu0 %v1472
    %v1474 = vand.u32 %v1136, 4294901760
    %v1475 = vsub.f32 %v1136, %v1474
    %v1476 = vand.u32 %v1475, 4294901760
    %1477 = vmatpush.msra.mxu0 %v1476
    %v1478 = vand.u32 %v1134, 4294901760
    %1479 = vmatmul.f32.gmra.mxu0 %v1478
    %v1480 = vpop.f32.mrf.mxu0
    %v1481 = vadd.f32 %v1406, %v1480
    %v1482 = vand.u32 %v1135, 4294901760
    %1483 = vmatmul.f32.gmra.mxu0 %v1482
    %v1484 = vpop.f32.mrf.mxu0
    %v1485 = vadd.f32 %v1412, %v1484
    %1486 = vdwg.mxu0
    %v1487 = vand.u32 %v1151, 4294901760
    %1488 = vmatpush.msra.mxu0 %v1487
    %v1489 = vand.u32 %v1150, 4294901760
    %1490 = vmatpush.msra.mxu0 %v1489
    %v1491 = vand.u32 %v1149, 4294901760
    %1492 = vmatpush.msra.mxu0 %v1491
    %v1493 = vand.u32 %v1148, 4294901760
    %1494 = vmatpush.msra.mxu0 %v1493
    %v1495 = vand.u32 %v1147, 4294901760
    %1496 = vmatpush.msra.mxu0 %v1495
    %v1497 = vand.u32 %v1146, 4294901760
    %1498 = vmatpush.msra.mxu0 %v1497
    %v1499 = vand.u32 %v1145, 4294901760
    %1500 = vmatpush.msra.mxu0 %v1499
    %v1501 = vand.u32 %v1144, 4294901760
    %1502 = vmatpush.msra.mxu0 %v1501
    %v1503 = vand.u32 %v1143, 4294901760
    %1504 = vmatpush.msra.mxu0 %v1503
    %v1505 = vand.u32 %v1142, 4294901760
    %1506 = vmatpush.msra.mxu0 %v1505
    %v1507 = vand.u32 %v1141, 4294901760
    %1508 = vmatpush.msra.mxu0 %v1507
    %v1509 = vand.u32 %v1140, 4294901760
    %1510 = vmatpush.msra.mxu0 %v1509
    %v1511 = vand.u32 %v1139, 4294901760
    %1512 = vmatpush.msra.mxu0 %v1511
    %v1513 = vand.u32 %v1138, 4294901760
    %1514 = vmatpush.msra.mxu0 %v1513
    %v1515 = vand.u32 %v1137, 4294901760
    %1516 = vmatpush.msra.mxu0 %v1515
    %v1517 = vand.u32 %v1136, 4294901760
    %1518 = vmatpush.msra.mxu0 %v1517
    %v1519 = vand.u32 %v1134, 4294901760
    %1520 = vmatmul.f32.gmra.mxu0 %v1519
    %v1521 = vpop.f32.mrf.mxu0
    %v1522 = vadd.f32 %v1481, %v1521
    %v1523 = vand.u32 %v1135, 4294901760
    %1524 = vmatmul.f32.gmra.mxu0 %v1523
    %v1525 = vpop.f32.mrf.mxu0
    %v1526 = vadd.f32 %v1485, %v1525
    %1527 = vdwg.mxu0
    %v1528 = vxor.u32 %v1522, 2147483648
    %v1529 = vxor.u32 %v1526, 2147483648
    %v1530 = vmul.f32 %v1528, 1.442695
    %v1531 = vpow.pop %v1530
    %v1532 = vmul.f32 %v1529, 1.442695
    %v1533 = vpow.pop %v1532
    %v1534 = vadd.f32 %v1531, 1.0
    %v1535 = vadd.f32 %v1533, 1.0
    %v1536 = vrcp.pop %v1534
    %v1537 = vmul.f32 %v1534, %v1536
    %v1538 = vsub.f32 1.0, %v1537
    %v1539 = vmul.f32 %v1536, %v1538
    %v1540 = vadd.f32 %v1536, %v1539
    %vm1541 = vweird.f32 %v1534
    %vm1542 = vweird.f32 %v1536
    %vm1543 = vmor %vm1541, %vm1542
    %v1544 = vsel %vm1543, %v1536, %v1540
    %v1545 = vand.u32 2147483647, %v1534
    %vm1546 = vcmp.eq.f32.partialorder %v1545, 8.507059e+37
    %v1547 = vand.u32 %v1534, 2147483648
    %v1548 = vor.u32 1.1754944e-38, %v1547
    %v1549 = vsel %vm1546, %v1548, %v1544
    %v1550 = vmul.f32 1.0, %v1549
    %v1551 = vrcp.pop %v1535
    %v1552 = vmul.f32 %v1535, %v1551
    %v1553 = vsub.f32 1.0, %v1552
    %v1554 = vmul.f32 %v1551, %v1553
    %v1555 = vadd.f32 %v1551, %v1554
    %vm1556 = vweird.f32 %v1535
    %vm1557 = vweird.f32 %v1551
    %vm1558 = vmor %vm1556, %vm1557
    %v1559 = vsel %vm1558, %v1551, %v1555
    %v1560 = vand.u32 2147483647, %v1535
    %vm1561 = vcmp.eq.f32.partialorder %v1560, 8.507059e+37
    %v1562 = vand.u32 %v1535, 2147483648
    %v1563 = vor.u32 1.1754944e-38, %v1562
    %v1564 = vsel %vm1561, %v1563, %v1559
    %v1565 = vmul.f32 1.0, %v1564
    %v1566 = vmul.f32 %v1522, %v1550
    %v1567 = vmul.f32 %v1526, %v1565
    %1568 = vst [vmem:[#allocation11] sm:$0xff] %v1566
    %1569 = vst [vmem:[#allocation11 + $0x8] sm:$0xff] %v1567
    // Predicated region
    $region50: #{tpu_custom_call.1} parent=1 // pred_check
      _
    $region51: #{tpu_custom_call.1} parent=1 // pred_check_branch
      %1571 = sbr.rel (0) target = $region53
    $region52: #{tpu_custom_call.1} parent=1 // pred_region
      %1573 = vsyncadd [#allocation4], 0
      %s1574 = sshll.u32 [#allocation11], 4
      %s1575 = int_to_ptr.vmem [resolvable:$true] %s1574
      %s1576 = sshll.u32 %s7, 4
      %s1577 = int_to_ptr.hbm [resolvable:$true] %s1576
      %1582 = dma.vmem_to_hbm [thread:$0]  %s1575, 256, %s1577, [#allocation4], 128, 128, 8
    $region53: #{tpu_custom_call.1} parent=1 // pred_fallthru
      _
    // Predicated region
    $region54: #{tpu_custom_call.1} parent=1 // pred_check
      _
    $region55: #{tpu_custom_call.1} parent=1 // pred_check_branch
      %1584 = sbr.rel (0) target = $region57
    $region56: #{tpu_custom_call.1} parent=1 // pred_region
      %1586 = dma.done [#allocation4], 256
    $region57: #{tpu_custom_call.1} parent=1 // pred_fallthru
      _
    %1587 = vsyncpa [#allocation3], 1
    %1588 = vsyncpa [#allocation6], 1
    %1589 = vsyncpa [#allocation9], 1
    %1590 = vsyncpa [#allocation4], 1

</llo_original>
